<compile_context>
chip_gen: v6e
topology: v6e:2x2x1
jax: 0.10.0
libtpu: 0.0.40
codegen_flags: <defaults>
</compile_context>

<pallas_src>
import jax
import jax.numpy as jnp
from jax.experimental import pallas as pl
from jax.experimental.pallas import tpu as pltpu


def _round_up(x, m):
    return ((x + m - 1) // m) * m


def _lane_pad_multiple():
    """v6e/v7x have a 2x256^2 MXU -> pad N dims to 256; <=v5 chips use 128."""
    try:
        kind = jax.devices()[0].device_kind.lower()
    except Exception:
        return 128
    for tag in ("v2", "v3", "v4", "v5"):
        if tag in kind:
            return 128
    return 256


def hybrid_embed_kernel(p_ref, wc_ref, bc_ref, wp_ref, bp_ref, o_ref):
    """(tile_m,K)@(K,F)+bias, ReLU, then (tile_m,F)@(F,E)+bias, all MXU 2-D matmuls."""
    tile_m = o_ref.shape[0]
    # Two row sub-chunks: next chunk's MXU work overlaps this chunk's VPU
    # epilogue and the live f32 `feat` intermediate is halved.
    n_chunks = 2 if (tile_m % 32 == 0) else 1
    chunk = tile_m // n_chunks
    wc = wc_ref[...]          # hoisted resident operands (loaded once per step)
    bc = bc_ref[...]
    wp = wp_ref[...]
    bp = bp_ref[...]
    for c in range(n_chunks):                       # static unroll (<= 2)
        rows = pl.ds(c * chunk, chunk)
        feat = jnp.dot(p_ref[rows, :], wc, preferred_element_type=jnp.float32)
        feat = jnp.maximum(feat + bc, 0.0).astype(wp.dtype)
        out = jnp.dot(feat, wp, preferred_element_type=jnp.float32) + bp
        o_ref[rows, :] = out.astype(o_ref.dtype)


def _pallas_forward(patches, wc, bc, wp, bp, *, tile_m, M_pad, K_pad, F_pad,
                    E_pad, out_dtype, vmem_limit, single_buffer_weights):
    def resident(shape):
        # Constant index map -> never re-DMA'd across grid steps; single
        # buffering halves the resident-weight VMEM footprint.
        if single_buffer_weights:
            return pl.BlockSpec(shape, lambda m: (0, 0),
                                pipeline_mode=pl.Buffered(1))
        return pl.BlockSpec(shape, lambda m: (0, 0))

    return pl.pallas_call(
        hybrid_embed_kernel,
        out_shape=jax.ShapeDtypeStruct((M_pad, E_pad), out_dtype),
        grid_spec=pltpu.PrefetchScalarGridSpec(
            num_scalar_prefetch=0,
            grid=(M_pad // tile_m,),
            in_specs=[
                pl.BlockSpec((tile_m, K_pad), lambda m: (m, 0)),
                resident((K_pad, F_pad)),
                resident((1, F_pad)),
                resident((F_pad, E_pad)),
                resident((1, E_pad)),
            ],
            out_specs=pl.BlockSpec((tile_m, E_pad), lambda m: (m, 0)),
        ),
        compiler_params=pltpu.CompilerParams(
            dimension_semantics=("parallel",),
            vmem_limit_bytes=vmem_limit),
    )(patches, wc, bc, wp, bp)


def hybrid_embed(x_nchw, conv_w, conv_b, proj_w, proj_b, patch=4,
                 tile_m=512, compute_dtype=jnp.bfloat16, out_dtype=None):
    """x_nchw: (B, C, H, W) -> (B, num_patches, embed_dim)."""
    B, C, H, W = x_nchw.shape
    Fh, Fw = H // patch, W // patch
    num_patches = Fh * Fw
    feature_dim = conv_w.shape[0]       # Conv2d weight: (out_c, in_c, kh, kw)
    embed_dim = proj_w.shape[0]         # Linear weight: (out, in)
    K = C * patch * patch
    M = B * num_patches
    out_dtype = x_nchw.dtype if out_dtype is None else out_dtype

    n_mult = _lane_pad_multiple()
    K_pad = _round_up(K, 128)
    F_pad = _round_up(feature_dim, n_mult)
    E_pad = _round_up(embed_dim, n_mult)

    # Token-dim tiling: multiple of 16 (bf16 sublane packing); keep >=2 grid
    # steps when M allows so both v7x TensorCores get work.
    M16 = _round_up(M, 16)
    tile_m = _round_up(min(tile_m, M16), 16)
    if tile_m >= M16 and M16 >= 32:
        tile_m = _round_up(M16 // 2, 16)
    M_pad = _round_up(M16, tile_m)

    # Cast BEFORE the im2col transpose/pad (halves wrapper HBM traffic);
    # pad only when actually needed.  Zero padding keeps the math exact.
    # TODO(synk): the im2col transpose itself remains a separate XLA HBM pass;
    # a pre-patchified upstream layout would remove it entirely.
    x = x_nchw.astype(compute_dtype)
    patches = x.reshape(B, C, Fh, patch, Fw, patch)
    patches = patches.transpose(0, 2, 4, 1, 3, 5).reshape(M, K)
    if M_pad != M or K_pad != K:
        patches = jnp.pad(patches, ((0, M_pad - M), (0, K_pad - K)))

    # Small weight/bias operands: (K,N) layout, lane-dense zero padding.
    wc = conv_w.reshape(feature_dim, K).T.astype(compute_dtype)         # (K, F)
    wc = jnp.pad(wc, ((0, K_pad - K), (0, F_pad - feature_dim)))
    bc = jnp.pad(conv_b.astype(jnp.float32),
                 (0, F_pad - feature_dim)).reshape(1, F_pad)
    wp = proj_w.T.astype(compute_dtype)                                 # (F, E)
    wp = jnp.pad(wp, ((0, F_pad - feature_dim), (0, E_pad - embed_dim)))
    bp = jnp.pad(proj_b.astype(jnp.float32),
                 (0, E_pad - embed_dim)).reshape(1, E_pad)

    comp_bytes = jnp.dtype(compute_dtype).itemsize
    out_bytes = jnp.dtype(out_dtype).itemsize
    need = (2 * tile_m * K_pad * comp_bytes              # double-buffered input tile
            + 2 * tile_m * E_pad * out_bytes             # double-buffered output tile
            + (K_pad * F_pad + F_pad * E_pad) * comp_bytes
            + (F_pad + E_pad) * 4                        # biases (f32)
            + tile_m * (F_pad + E_pad) * 4)              # f32 intermediates
    vmem_limit = int(min(max(2 * need, 32 * 1024 * 1024), 96 * 1024 * 1024))

    kwargs = dict(tile_m=tile_m, M_pad=M_pad, K_pad=K_pad, F_pad=F_pad,
                  E_pad=E_pad, out_dtype=out_dtype, vmem_limit=vmem_limit)
    try:
        out = jax.block_until_ready(
            _pallas_forward(patches, wc, bc, wp, bp,
                            single_buffer_weights=True, **kwargs))
    except Exception:
        # TODO(synk): pl.Buffered(1) single-buffering of resident weights is
        # not available on every jax release; fall back to default buffering.
        out = _pallas_forward(patches, wc, bc, wp, bp,
                              single_buffer_weights=False, **kwargs)

    # Slice only the dims that were actually padded (avoid strided-copy epilogue).
    if E_pad != embed_dim:
        out = out[:, :embed_dim]
    if M_pad != M:
        out = out[:M]
    return out.reshape(B, num_patches, embed_dim)


def hybrid_embed_ref(x_nchw, conv_w, conv_b, proj_w, proj_b, patch=4):
    """Pure-JAX reference of the exact PyTorch semantics (high precision)."""
    feat = jax.lax.conv_general_dilated(
        x_nchw, conv_w, window_strides=(patch, patch), padding="VALID",
        dimension_numbers=("NCHW", "OIHW", "NCHW"),
        precision=jax.lax.Precision.HIGHEST)
    feat = jnp.maximum(feat + conv_b[None, :, None, None], 0.0)
    B, Cf, Fh, Fw = feat.shape
    tok = feat.reshape(B, Cf, Fh * Fw).transpose(0, 2, 1)   # flatten(2).transpose(1,2)
    return jnp.matmul(tok, proj_w.T,
                      precision=jax.lax.Precision.HIGHEST) + proj_b   # nn.Linear


if __name__ == "__main__":
    B, C, H, W = 2, 4, 16, 16
    patch = 4
    feature_dim = 32
    embed_dim = 32

    key = jax.random.PRNGKey(0)
    kx, kcw, kcb, kpw, kpb = jax.random.split(key, 5)
    x = jax.random.normal(kx, (B, C, H, W), dtype=jnp.float32)
    conv_w = 0.1 * jax.random.normal(kcw, (feature_dim, C, patch, patch), jnp.float32)
    conv_b = 0.1 * jax.random.normal(kcb, (feature_dim,), jnp.float32)
    proj_w = 0.1 * jax.random.normal(kpw, (embed_dim, feature_dim), jnp.float32)
    proj_b = 0.1 * jax.random.normal(kpb, (embed_dim,), jnp.float32)

    ref = hybrid_embed_ref(x, conv_w, conv_b, proj_w, proj_b, patch=patch)

    # f32-operand path (tight verification of the fused semantics).
    out_f32 = jax.block_until_ready(
        hybrid_embed(x, conv_w, conv_b, proj_w, proj_b, patch=patch,
                     compute_dtype=jnp.float32))
    assert out_f32.shape == (B, (H // patch) * (W // patch), embed_dim)
    assert jnp.allclose(out_f32, ref, atol=1e-2, rtol=1e-2)

    # Fast path: bf16 matmul operands, f32 accumulation.
    out_bf16 = jax.block_until_ready(
        hybrid_embed(x, conv_w, conv_b, proj_w, proj_b, patch=patch,
                     compute_dtype=jnp.bfloat16))
    assert out_bf16.shape == (B, (H // patch) * (W // patch), embed_dim)
    assert jnp.allclose(out_bf16, ref, atol=3e-2, rtol=3e-2)

    print("KERNEL_OK")
</pallas_src>

<mosaic_0001>
module attributes {stable_mosaic.version = 11 : i64} {
  func.func @hybrid_embed_kernel(%arg0: i32, %arg1: memref<16x128xf32, #tpu.memory_space<vmem>>, %arg2: memref<128x256xf32, #tpu.memory_space<vmem>>, %arg3: memref<1x256xf32, #tpu.memory_space<vmem>>, %arg4: memref<256x256xf32, #tpu.memory_space<vmem>>, %arg5: memref<1x256xf32, #tpu.memory_space<vmem>>, %arg6: memref<16x256xf32, #tpu.memory_space<vmem>>) attributes {dimension_semantics = [#tpu.dimension_semantics<parallel>], iteration_bounds = array<i64: 2>, scalar_prefetch = 0 : i64, scratch_operands = 0 : i64, tpu.core_type = #tpu.core_type<tc>, window_params = [{transform_indices = @transform_0, window_bounds = array<i64: 16, 128>}, {pipeline_mode = #tpu.pipeline_mode<synchronous>, transform_indices = @transform_1, window_bounds = array<i64: 128, 256>}, {pipeline_mode = #tpu.pipeline_mode<synchronous>, transform_indices = @transform_2, window_bounds = array<i64: 1, 256>}, {pipeline_mode = #tpu.pipeline_mode<synchronous>, transform_indices = @transform_3, window_bounds = array<i64: 256, 256>}, {pipeline_mode = #tpu.pipeline_mode<synchronous>, transform_indices = @transform_4, window_bounds = array<i64: 1, 256>}, {transform_indices = @transform_5, window_bounds = array<i64: 16, 256>}]} {
    %c0 = arith.constant 0 : index
    %c0_0 = arith.constant 0 : index
    %0 = vector.load %arg2[%c0, %c0_0] : memref<128x256xf32, #tpu.memory_space<vmem>>, vector<128x256xf32>
    %c0_1 = arith.constant 0 : index
    %c0_2 = arith.constant 0 : index
    %1 = vector.load %arg3[%c0_1, %c0_2] : memref<1x256xf32, #tpu.memory_space<vmem>>, vector<1x256xf32>
    %c0_3 = arith.constant 0 : index
    %c0_4 = arith.constant 0 : index
    %2 = vector.load %arg4[%c0_3, %c0_4] : memref<256x256xf32, #tpu.memory_space<vmem>>, vector<256x256xf32>
    %c0_5 = arith.constant 0 : index
    %c0_6 = arith.constant 0 : index
    %3 = vector.load %arg5[%c0_5, %c0_6] : memref<1x256xf32, #tpu.memory_space<vmem>>, vector<1x256xf32>
    %c0_7 = arith.constant 0 : index
    %c0_8 = arith.constant 0 : index
    %4 = vector.load %arg1[%c0_7, %c0_8] : memref<16x128xf32, #tpu.memory_space<vmem>>, vector<16x128xf32>
    %cst = arith.constant dense<0.000000e+00> : vector<16x256xf32>
    %5 = tpu.matmul %4, %0, %cst {dimension_numbers = #tpu.dot_dimension_numbers<[1], [0], [0], [1], [0, 0, 1, 1], [], []>} : vector<16x128xf32>, vector<128x256xf32>, vector<16x256xf32> -> vector<16x256xf32>
    %6 = vector.broadcast %1 : vector<1x256xf32> to vector<16x256xf32>
    %7 = arith.addf %5, %6 : vector<16x256xf32>
    %cst_9 = arith.constant 0.000000e+00 : f32
    %8 = vector.broadcast %cst_9 : f32 to vector<16x256xf32>
    %9 = arith.maximumf %7, %8 : vector<16x256xf32>
    %cst_10 = arith.constant dense<0.000000e+00> : vector<16x256xf32>
    %10 = tpu.matmul %9, %2, %cst_10 {dimension_numbers = #tpu.dot_dimension_numbers<[1], [0], [0], [1], [0, 0, 1, 1], [], []>} : vector<16x256xf32>, vector<256x256xf32>, vector<16x256xf32> -> vector<16x256xf32>
    %11 = vector.broadcast %3 : vector<1x256xf32> to vector<16x256xf32>
    %12 = arith.addf %10, %11 : vector<16x256xf32>
    %c0_11 = arith.constant 0 : index
    %c0_12 = arith.constant 0 : index
    %13 = vector.load %arg6[%c0_11, %c0_12] : memref<16x256xf32, #tpu.memory_space<vmem>>, vector<16x256xf32>
    tpu.vector_store %arg6[%c0_11, %c0_12], %12 {strides = array<i32>} : memref<16x256xf32, #tpu.memory_space<vmem>>, vector<16x256xf32>,
    return
  }
  func.func @transform_0(%arg0: i32) -> (i32, i32) {
    %c0_i32 = arith.constant 0 : i32
    %c0_i32_0 = arith.constant 0 : i32
    return %arg0, %c0_i32 : i32, i32
  }
  func.func @transform_1(%arg0: i32) -> (i32, i32) {
    %c0_i32 = arith.constant 0 : i32
    %c0_i32_0 = arith.constant 0 : i32
    %c0_i32_1 = arith.constant 0 : i32
    return %c0_i32, %c0_i32_0 : i32, i32
  }
  func.func @transform_2(%arg0: i32) -> (i32, i32) {
    %c0_i32 = arith.constant 0 : i32
    %c0_i32_0 = arith.constant 0 : i32
    %c0_i32_1 = arith.constant 0 : i32
    return %c0_i32, %c0_i32_0 : i32, i32
  }
  func.func @transform_3(%arg0: i32) -> (i32, i32) {
    %c0_i32 = arith.constant 0 : i32
    %c0_i32_0 = arith.constant 0 : i32
    %c0_i32_1 = arith.constant 0 : i32
    return %c0_i32, %c0_i32_0 : i32, i32
  }
  func.func @transform_4(%arg0: i32) -> (i32, i32) {
    %c0_i32 = arith.constant 0 : i32
    %c0_i32_0 = arith.constant 0 : i32
    %c0_i32_1 = arith.constant 0 : i32
    return %c0_i32, %c0_i32_0 : i32, i32
  }
  func.func @transform_5(%arg0: i32) -> (i32, i32) {
    %c0_i32 = arith.constant 0 : i32
    %c0_i32_0 = arith.constant 0 : i32
    return %arg0, %c0_i32 : i32, i32
  }
}

module attributes {stable_mosaic.version = 11 : i64} {
  func.func @hybrid_embed_kernel(%arg0: i32, %arg1: memref<16x128xf32, #tpu.memory_space<vmem>>, %arg2: memref<128x256xf32, #tpu.memory_space<vmem>>, %arg3: memref<1x256xf32, #tpu.memory_space<vmem>>, %arg4: memref<256x256xf32, #tpu.memory_space<vmem>>, %arg5: memref<1x256xf32, #tpu.memory_space<vmem>>, %arg6: memref<16x256xf32, #tpu.memory_space<vmem>>) attributes {dimension_semantics = [#tpu.dimension_semantics<parallel>], iteration_bounds = array<i64: 2>, scalar_prefetch = 0 : i64, scratch_operands = 0 : i64, tpu.core_type = #tpu.core_type<tc>, window_params = [{transform_indices = @transform_0, window_bounds = array<i64: 16, 128>}, {pipeline_mode = #tpu.pipeline_mode<synchronous>, transform_indices = @transform_1, window_bounds = array<i64: 128, 256>}, {pipeline_mode = #tpu.pipeline_mode<synchronous>, transform_indices = @transform_2, window_bounds = array<i64: 1, 256>}, {pipeline_mode = #tpu.pipeline_mode<synchronous>, transform_indices = @transform_3, window_bounds = array<i64: 256, 256>}, {pipeline_mode = #tpu.pipeline_mode<synchronous>, transform_indices = @transform_4, window_bounds = array<i64: 1, 256>}, {transform_indices = @transform_5, window_bounds = array<i64: 16, 256>}]} {
    %c0 = arith.constant 0 : index
    %c0_0 = arith.constant 0 : index
    %0 = vector.load %arg2[%c0, %c0_0] : memref<128x256xf32, #tpu.memory_space<vmem>>, vector<128x256xf32>
    %c0_1 = arith.constant 0 : index
    %c0_2 = arith.constant 0 : index
    %1 = vector.load %arg3[%c0_1, %c0_2] : memref<1x256xf32, #tpu.memory_space<vmem>>, vector<1x256xf32>
    %c0_3 = arith.constant 0 : index
    %c0_4 = arith.constant 0 : index
    %2 = vector.load %arg4[%c0_3, %c0_4] : memref<256x256xf32, #tpu.memory_space<vmem>>, vector<256x256xf32>
    %c0_5 = arith.constant 0 : index
    %c0_6 = arith.constant 0 : index
    %3 = vector.load %arg5[%c0_5, %c0_6] : memref<1x256xf32, #tpu.memory_space<vmem>>, vector<1x256xf32>
    %c0_7 = arith.constant 0 : index
    %c0_8 = arith.constant 0 : index
    %4 = vector.load %arg1[%c0_7, %c0_8] : memref<16x128xf32, #tpu.memory_space<vmem>>, vector<16x128xf32>
    %cst = arith.constant dense<0.000000e+00> : vector<16x256xf32>
    %5 = tpu.matmul %4, %0, %cst {dimension_numbers = #tpu.dot_dimension_numbers<[1], [0], [0], [1], [0, 0, 1, 1], [], []>} : vector<16x128xf32>, vector<128x256xf32>, vector<16x256xf32> -> vector<16x256xf32>
    %6 = vector.broadcast %1 : vector<1x256xf32> to vector<16x256xf32>
    %7 = arith.addf %5, %6 : vector<16x256xf32>
    %cst_9 = arith.constant 0.000000e+00 : f32
    %8 = vector.broadcast %cst_9 : f32 to vector<16x256xf32>
    %9 = arith.maximumf %7, %8 : vector<16x256xf32>
    %cst_10 = arith.constant dense<0.000000e+00> : vector<16x256xf32>
    %10 = tpu.matmul %9, %2, %cst_10 {dimension_numbers = #tpu.dot_dimension_numbers<[1], [0], [0], [1], [0, 0, 1, 1], [], []>} : vector<16x256xf32>, vector<256x256xf32>, vector<16x256xf32> -> vector<16x256xf32>
    %11 = vector.broadcast %3 : vector<1x256xf32> to vector<16x256xf32>
    %12 = arith.addf %10, %11 : vector<16x256xf32>
    %c0_11 = arith.constant 0 : index
    %c0_12 = arith.constant 0 : index
    %13 = vector.load %arg6[%c0_11, %c0_12] : memref<16x256xf32, #tpu.memory_space<vmem>>, vector<16x256xf32>
    tpu.vector_store %arg6[%c0_11, %c0_12], %12 {strides = array<i32>} : memref<16x256xf32, #tpu.memory_space<vmem>>, vector<16x256xf32>,
    return
  }
  func.func @transform_0(%arg0: i32) -> (i32, i32) {
    %c0_i32 = arith.constant 0 : i32
    %c0_i32_0 = arith.constant 0 : i32
    return %arg0, %c0_i32 : i32, i32
  }
  func.func @transform_1(%arg0: i32) -> (i32, i32) {
    %c0_i32 = arith.constant 0 : i32
    %c0_i32_0 = arith.constant 0 : i32
    %c0_i32_1 = arith.constant 0 : i32
    return %c0_i32, %c0_i32_0 : i32, i32
  }
  func.func @transform_2(%arg0: i32) -> (i32, i32) {
    %c0_i32 = arith.constant 0 : i32
    %c0_i32_0 = arith.constant 0 : i32
    %c0_i32_1 = arith.constant 0 : i32
    return %c0_i32, %c0_i32_0 : i32, i32
  }
  func.func @transform_3(%arg0: i32) -> (i32, i32) {
    %c0_i32 = arith.constant 0 : i32
    %c0_i32_0 = arith.constant 0 : i32
    %c0_i32_1 = arith.constant 0 : i32
    return %c0_i32, %c0_i32_0 : i32, i32
  }
  func.func @transform_4(%arg0: i32) -> (i32, i32) {
    %c0_i32 = arith.constant 0 : i32
    %c0_i32_0 = arith.constant 0 : i32
    %c0_i32_1 = arith.constant 0 : i32
    return %c0_i32, %c0_i32_0 : i32, i32
  }
  func.func @transform_5(%arg0: i32) -> (i32, i32) {
    %c0_i32 = arith.constant 0 : i32
    %c0_i32_0 = arith.constant 0 : i32
    return %arg0, %c0_i32 : i32, i32
  }
}

</mosaic_0001>

<llo_original>
// kernel: tpu_custom_call.1
$region0: #{tpu_custom_call.1}
  #allocation0 [shape = 'u32[]', space=smem, size = 0x4, offset = 0x4, fixed_abs, tag = 'smem constant byte address 0x4 - core index']
  #allocation1 [shape = 'u32[144,128]{1,0:T(1,128)}', space=vmem, size = 0x12000, scoped, tag = 'internal scratch']
  %s0 = inlined_call_operand.hbm [shape: f32[32,128], index: 0, kind: input, shape index: {}]
  %s1 = inlined_call_operand.hbm [shape: f32[128,256], index: 1, kind: input, shape index: {}]
  %s2 = inlined_call_operand.vmem [shape: f32[1,256], index: 2, kind: input, shape index: {}]
  %s3 = inlined_call_operand.hbm [shape: f32[256,256], index: 3, kind: input, shape index: {}]
  %s4 = inlined_call_operand.vmem [shape: f32[1,256], index: 4, kind: input, shape index: {}]
  %s5 = inlined_call_operand.hbm [shape: f32[32,256], index: 5, kind: output, shape index: {}]
  %s6 = sld [smem:[#allocation0]]
  $region65: #{tpu_custom_call.1} parent=0
    _
  %s8 = ssub.s32 1, %s6
  %s9 = scalar_select 0, %s8, %s6
  $region1: #{tpu_custom_call.1} parent=0
    #allocation2 [shape = 'u8[16384]{0}', space=vmem, size = 0x4000, scoped, tag = 'input window, operand 0']
    #allocation3 [shape = 's32[2]{0}', space=sflag, size = 0x8, scoped, tag = 'scoped memory for tpu_custom_call.1']
    #allocation4 [shape = 's32[2]{0}', space=sflag, size = 0x8, scoped, tag = 'scoped memory for tpu_custom_call.1']
    #allocation5 [shape = 'u8[131072]{0}', space=vmem, size = 0x20000, scoped, tag = 'input window, operand 1, single buffered']
    #allocation6 [shape = 's32[1]{0}', space=sflag, size = 0x4, scoped, tag = 'scoped memory for tpu_custom_call.1']
    #allocation7 [shape = 'u8[262144]{0}', space=vmem, size = 0x40000, scoped, tag = 'input window, operand 3, single buffered']
    #allocation8 [shape = 'u8[32768]{0}', space=vmem, size = 0x8000, scoped, tag = 'output window, operand 0']
    %10 = vsyncpa [#allocation3], 0
    %s11 = scalar_lea.sflag [#allocation3], 1
    %12 = vsyncpa %s11, 0
    %13 = vsyncpa [#allocation6], 0
    %14 = vsyncpa [#allocation4], 0
    %s15 = scalar_lea.sflag [#allocation4], 1
    %16 = vsyncpa %s15, 0
    loop: start=0, step=1, limit=4
    $region2: #{tpu_custom_call.1} parent=1 // loop_pre_header
      _
    $region3: #{tpu_custom_call.1} parent=1 // loop_header
      %s18 = sphi 0, %s22
      %p19 = scmp.ge.s32.totalorder %s18, 4
      %s28 = sphi 0, %s30
      %s31 = sphi 0, %s28
      %s32 = sphi 0, %s31
      %s48 = sphi 0, %s32
      %s52 = sphi 0, %s52
      %s54 = sphi 0, %s52
      %s55 = sphi 0, %s54
      %s69 = sphi 0, %s55
      %s73 = sphi 0, %s73
      %s75 = sphi 0, %s73
      %s76 = sphi 0, %s75
      %s90 = sphi 0, %s76
      %s94 = sphi 0, %s94
      %s96 = sphi 0, %s94
      %s97 = sphi 0, %s96
      %s111 = sphi 0, %s97
      %s115 = sphi 0, %s115
      %s117 = sphi 0, %s115
      %s118 = sphi 0, %s117
      %s132 = sphi 0, %s118
      %s138 = sphi 0, %s140
      %s141 = sphi 0, %s138
      %s142 = sphi 0, %s141
      %s158 = sphi 0, %s142
    $region4: #{tpu_custom_call.1} parent=1 // loop_header_branch
      %21 = sbr.rel (%p19) target = $region8
    $region5: #{tpu_custom_call.1} parent=1 // loop_body
      %s23 = ssub.s32 %s18, 1
      %s24 = ssub.s32 %s18, 2
      %s25 = sadd.s32 %s18, 1
      %s26 = ssub.s32 %s18, %s25
      %p27 = scmp.eq.s32.totalorder %s26, 0
      %s29 = sadd.s32 %s28, 1
      %s30 = scalar_select %p27, %s28, %s29
      %p33 = pneg %p27
      %p34 = scmp.eq.s32.totalorder %s18, 1
      %p35 = por %p33, %p34
      %p36 = scmp.ne.s32.totalorder %s28, %s31
      %p37 = scmp.eq.s32.totalorder %s18, 0
      %p38 = por %p36, %p37
      %p39 = scmp.ne.s32.totalorder %s28, %s31
      %p40 = scmp.eq.s32.totalorder %s23, 1
      %p41 = por %p39, %p40
      %p42 = scmp.ne.s32.totalorder %s31, %s32
      %p43 = scmp.eq.s32.totalorder %s23, 0
      %p44 = por %p42, %p43
      %p45 = scmp.ne.s32.totalorder %s31, %s32
      %p46 = scmp.eq.s32.totalorder %s24, 1
      %p47 = por %p45, %p46
      %p49 = scmp.ne.s32.totalorder %s32, %s48
      %p50 = scmp.eq.s32.totalorder %s24, 0
      %p51 = por %p49, %p50
      %s53 = sadd.s32 %s52, 1
      %p56 = scmp.eq.s32.totalorder %s18, 1
      %p57 = scmp.ne.s32.totalorder %s52, %s54
      %p58 = scmp.eq.s32.totalorder %s18, 0
      %p59 = por %p57, %p58
      %p60 = scmp.ne.s32.totalorder %s52, %s54
      %p61 = scmp.eq.s32.totalorder %s23, 1
      %p62 = por %p60, %p61
      %p63 = scmp.ne.s32.totalorder %s54, %s55
      %p64 = scmp.eq.s32.totalorder %s23, 0
      %p65 = por %p63, %p64
      %p66 = scmp.ne.s32.totalorder %s54, %s55
      %p67 = scmp.eq.s32.totalorder %s24, 1
      %p68 = por %p66, %p67
      %p70 = scmp.ne.s32.totalorder %s55, %s69
      %p71 = scmp.eq.s32.totalorder %s24, 0
      %p72 = por %p70, %p71
      %s74 = sadd.s32 %s73, 1
      %p77 = scmp.eq.s32.totalorder %s18, 1
      %p78 = scmp.ne.s32.totalorder %s73, %s75
      %p79 = scmp.eq.s32.totalorder %s18, 0
      %p80 = por %p78, %p79
      %p81 = scmp.ne.s32.totalorder %s73, %s75
      %p82 = scmp.eq.s32.totalorder %s23, 1
      %p83 = por %p81, %p82
      %p84 = scmp.ne.s32.totalorder %s75, %s76
      %p85 = scmp.eq.s32.totalorder %s23, 0
      %p86 = por %p84, %p85
      %p87 = scmp.ne.s32.totalorder %s75, %s76
      %p88 = scmp.eq.s32.totalorder %s24, 1
      %p89 = por %p87, %p88
      %p91 = scmp.ne.s32.totalorder %s76, %s90
      %p92 = scmp.eq.s32.totalorder %s24, 0
      %p93 = por %p91, %p92
      %s95 = sadd.s32 %s94, 1
      %p98 = scmp.eq.s32.totalorder %s18, 1
      %p99 = scmp.ne.s32.totalorder %s94, %s96
      %p100 = scmp.eq.s32.totalorder %s18, 0
      %p101 = por %p99, %p100
      %p102 = scmp.ne.s32.totalorder %s94, %s96
      %p103 = scmp.eq.s32.totalorder %s23, 1
      %p104 = por %p102, %p103
      %p105 = scmp.ne.s32.totalorder %s96, %s97
      %p106 = scmp.eq.s32.totalorder %s23, 0
      %p107 = por %p105, %p106
      %p108 = scmp.ne.s32.totalorder %s96, %s97
      %p109 = scmp.eq.s32.totalorder %s24, 1
      %p110 = por %p108, %p109
      %p112 = scmp.ne.s32.totalorder %s97, %s111
      %p113 = scmp.eq.s32.totalorder %s24, 0
      %p114 = por %p112, %p113
      %s116 = sadd.s32 %s115, 1
      %p119 = scmp.eq.s32.totalorder %s18, 1
      %p120 = scmp.ne.s32.totalorder %s115, %s117
      %p121 = scmp.eq.s32.totalorder %s18, 0
      %p122 = por %p120, %p121
      %p123 = scmp.ne.s32.totalorder %s115, %s117
      %p124 = scmp.eq.s32.totalorder %s23, 1
      %p125 = por %p123, %p124
      %p126 = scmp.ne.s32.totalorder %s117, %s118
      %p127 = scmp.eq.s32.totalorder %s23, 0
      %p128 = por %p126, %p127
      %p129 = scmp.ne.s32.totalorder %s117, %s118
      %p130 = scmp.eq.s32.totalorder %s24, 1
      %p131 = por %p129, %p130
      %p133 = scmp.ne.s32.totalorder %s118, %s132
      %p134 = scmp.eq.s32.totalorder %s24, 0
      %p135 = por %p133, %p134
      %s136 = ssub.s32 %s18, %s25
      %p137 = scmp.eq.s32.totalorder %s136, 0
      %s139 = sadd.s32 %s138, 1
      %s140 = scalar_select %p137, %s138, %s139
      %p143 = pneg %p137
      %p144 = scmp.eq.s32.totalorder %s18, 1
      %p145 = por %p143, %p144
      %p146 = scmp.ne.s32.totalorder %s138, %s141
      %p147 = scmp.eq.s32.totalorder %s18, 0
      %p148 = por %p146, %p147
      %p149 = scmp.ne.s32.totalorder %s138, %s141
      %p150 = scmp.eq.s32.totalorder %s23, 1
      %p151 = por %p149, %p150
      %p152 = scmp.ne.s32.totalorder %s141, %s142
      %p153 = scmp.eq.s32.totalorder %s23, 0
      %p154 = por %p152, %p153
      %p155 = scmp.ne.s32.totalorder %s141, %s142
      %p156 = scmp.eq.s32.totalorder %s24, 1
      %p157 = por %p155, %p156
      %p159 = scmp.ne.s32.totalorder %s142, %s158
      %p160 = scmp.eq.s32.totalorder %s24, 0
      %p161 = por %p159, %p160
      %p162 = scmp.le.s32.totalorder 1, %s18
      %p163 = scmp.lt.s32.totalorder %s18, 3
      %p164 = pnand %p162, %p163
      %p165 = pneg %p164
      // Predicated region
      $region9: #{tpu_custom_call.1} parent=5 // pred_check
        _
      $region10: #{tpu_custom_call.1} parent=5 // pred_check_branch
        %167 = sbr.rel (%p164) target = $region12
      $region11: #{tpu_custom_call.1} parent=5 // pred_region
        %s168 = ssub.s32 %s18, 1
        // Predicated region
        $region13: #{tpu_custom_call.1} parent=11 // pred_check
          %p169 = pneg %p65
        $region14: #{tpu_custom_call.1} parent=11 // pred_check_branch
          %171 = sbr.rel (%p169) target = $region16
        $region15: #{tpu_custom_call.1} parent=11 // pred_region
          %s173 = ssub.s32 4096, 4096
          %174 = vsyncadd [#allocation6], %s173
          %s175 = sshll.u32 [#allocation5], 4
          %s176 = int_to_ptr.vmem [resolvable:$true] %s175
          %181 = dma.hbm_to_vmem [thread:$0]  %s1, 4096, %s176, [#allocation6], 256, 256, 16
        $region16: #{tpu_custom_call.1} parent=11 // pred_fallthru
          _
        // Predicated region
        $region17: #{tpu_custom_call.1} parent=11 // pred_check
          %p182 = pneg %p86
        $region18: #{tpu_custom_call.1} parent=11 // pred_check_branch
          %184 = sbr.rel (%p182) target = $region20
        $region19: #{tpu_custom_call.1} parent=11 // pred_region
          _
        $region20: #{tpu_custom_call.1} parent=11 // pred_fallthru
          _
        // Predicated region
        $region21: #{tpu_custom_call.1} parent=11 // pred_check
          %p185 = pneg %p107
        $region22: #{tpu_custom_call.1} parent=11 // pred_check_branch
          %187 = sbr.rel (%p185) target = $region24
        $region23: #{tpu_custom_call.1} parent=11 // pred_region
          %s189 = ssub.s32 8192, 8192
          %190 = vsyncadd [#allocation6], %s189
          %s191 = sshll.u32 [#allocation7], 4
          %s192 = int_to_ptr.vmem [resolvable:$true] %s191
          %197 = dma.hbm_to_vmem [thread:$0]  %s3, 8192, %s192, [#allocation6], 256, 256, 16
        $region24: #{tpu_custom_call.1} parent=11 // pred_fallthru
          _
        // Predicated region
        $region25: #{tpu_custom_call.1} parent=11 // pred_check
          %p198 = pneg %p128
        $region26: #{tpu_custom_call.1} parent=11 // pred_check_branch
          %200 = sbr.rel (%p198) target = $region28
        $region27: #{tpu_custom_call.1} parent=11 // pred_region
          _
        $region28: #{tpu_custom_call.1} parent=11 // pred_fallthru
          _
      $region12: #{tpu_custom_call.1} parent=5 // pred_fallthru
        _
      %p201 = scmp.lt.s32.totalorder %s18, 2
      // Predicated region
      $region29: #{tpu_custom_call.1} parent=5 // pred_check
        %p202 = pneg %p201
      $region30: #{tpu_custom_call.1} parent=5 // pred_check_branch
        %204 = sbr.rel (%p202) target = $region32
      $region31: #{tpu_custom_call.1} parent=5 // pred_region
        // Predicated region
        $region33: #{tpu_custom_call.1} parent=31 // pred_check
          %p205 = pneg %p38
        $region34: #{tpu_custom_call.1} parent=31 // pred_check_branch
          %207 = sbr.rel (%p205) target = $region36
        $region35: #{tpu_custom_call.1} parent=31 // pred_region
          %s208 = sand.u32 %s28, 1
          %s209 = scalar_lea.sflag [#allocation3], %s208
          %s210 = sand.u32 %s28, 1
          %s211 = smul.addr %s210, 16
          %s212 = scalar_lea.vmem [#allocation2], %s211
          %s213 = smul.u32 2, %s18
          %s215 = ssub.s32 256, 256
          %216 = vsyncadd %s209, %s215
          %s217 = smul.addr %s213, 128
          %s218 = scalar_lea.hbm %s0, %s217
          %s219 = sshll.u32 %s212, 4
          %s220 = int_to_ptr.vmem [resolvable:$true] %s219
          %225 = dma.hbm_to_vmem [thread:$0]  %s218, 256, %s220, %s209, 128, 128, 8
        $region36: #{tpu_custom_call.1} parent=31 // pred_fallthru
          _
      $region32: #{tpu_custom_call.1} parent=5 // pred_fallthru
        _
      %p226 = scmp.le.s32.totalorder 1, %s18
      %p227 = scmp.lt.s32.totalorder %s18, 3
      %p228 = pnand %p226, %p227
      %p229 = pneg %p228
      // Predicated region
      $region37: #{tpu_custom_call.1} parent=5 // pred_check
        _
      $region38: #{tpu_custom_call.1} parent=5 // pred_check_branch
        %231 = sbr.rel (%p228) target = $region40
      $region39: #{tpu_custom_call.1} parent=5 // pred_region
        %s232 = ssub.s32 %s18, 1
        %s233 = sand.u32 %s31, 1
        %s234 = scalar_lea.sflag [#allocation3], %s233
        %s235 = sand.u32 %s31, 1
        %s236 = smul.addr %s235, 16
        %s237 = scalar_lea.vmem [#allocation2], %s236
        // Predicated region
        $region41: #{tpu_custom_call.1} parent=39 // pred_check
          %p238 = pneg %p44
        $region42: #{tpu_custom_call.1} parent=39 // pred_check_branch
          %240 = sbr.rel (%p238) target = $region44
        $region43: #{tpu_custom_call.1} parent=39 // pred_region
          %241 = dma.done %s234, 256
        $region44: #{tpu_custom_call.1} parent=39 // pred_fallthru
          _
        // Predicated region
        $region45: #{tpu_custom_call.1} parent=39 // pred_check
          %p242 = pneg %p65
        $region46: #{tpu_custom_call.1} parent=39 // pred_check_branch
          %244 = sbr.rel (%p242) target = $region48
        $region47: #{tpu_custom_call.1} parent=39 // pred_region
          %245 = dma.done [#allocation6], 4096
        $region48: #{tpu_custom_call.1} parent=39 // pred_fallthru
          _
        // Predicated region
        $region49: #{tpu_custom_call.1} parent=39 // pred_check
          %p246 = pneg %p107
        $region50: #{tpu_custom_call.1} parent=39 // pred_check_branch
          %248 = sbr.rel (%p246) target = $region52
        $region51: #{tpu_custom_call.1} parent=39 // pred_region
          %249 = dma.done [#allocation6], 8192
        $region52: #{tpu_custom_call.1} parent=39 // pred_fallthru
          _
        %s250 = sand.u32 %s31, 1
        %s251 = scalar_lea.sflag [#allocation3], %s250
        %s252 = sand.u32 %s31, 1
        %s253 = smul.addr %s252, 16
        %s254 = scalar_lea.vmem [#allocation2], %s253
        %p255 = pneg %p44
        %p256 = pneg %p41
        %p257 = pneg %p65
        %p258 = pneg %p62
        %p259 = pneg %p86
        %p260 = pneg %p83
        %p261 = pneg %p107
        %p262 = pneg %p104
        %p263 = pneg %p128
        %p264 = pneg %p125
        %p265 = pneg %p154
        %p266 = pneg %p151
        %s267 = sand.u32 %s141, 1
        %s268 = scalar_lea.sflag [#allocation4], %s267
        %s269 = sand.u32 %s141, 1
        %s270 = smul.addr %s269, 32
        %s271 = scalar_lea.vmem [#allocation8], %s270
        %s272 = smul.u32 2, %s23
        %s273 = smul.u32 2, %s23
        %v274 = vld [vmem:[#allocation5] sm:$0xff]
        %v275 = vld [vmem:[#allocation5 + $0x8] sm:$0xff]
        %v276 = vld [vmem:[#allocation5 + $0x10] sm:$0xff]
        %v277 = vld [vmem:[#allocation5 + $0x18] sm:$0xff]
        %v278 = vld [vmem:[#allocation5 + $0x20] sm:$0xff]
        %v279 = vld [vmem:[#allocation5 + $0x28] sm:$0xff]
        %v280 = vld [vmem:[#allocation5 + $0x30] sm:$0xff]
        %v281 = vld [vmem:[#allocation5 + $0x38] sm:$0xff]
        %v282 = vld [vmem:[#allocation5 + $0x40] sm:$0xff]
        %v283 = vld [vmem:[#allocation5 + $0x48] sm:$0xff]
        %v284 = vld [vmem:[#allocation5 + $0x50] sm:$0xff]
        %v285 = vld [vmem:[#allocation5 + $0x58] sm:$0xff]
        %v286 = vld [vmem:[#allocation5 + $0x60] sm:$0xff]
        %v287 = vld [vmem:[#allocation5 + $0x68] sm:$0xff]
        %v288 = vld [vmem:[#allocation5 + $0x70] sm:$0xff]
        %v289 = vld [vmem:[#allocation5 + $0x78] sm:$0xff]
        %v290 = vld [vmem:[#allocation5 + $0x80] sm:$0xff]
        %v291 = vld [vmem:[#allocation5 + $0x88] sm:$0xff]
        %v292 = vld [vmem:[#allocation5 + $0x90] sm:$0xff]
        %v293 = vld [vmem:[#allocation5 + $0x98] sm:$0xff]
        %v294 = vld [vmem:[#allocation5 + $0xa0] sm:$0xff]
        %v295 = vld [vmem:[#allocation5 + $0xa8] sm:$0xff]
        %v296 = vld [vmem:[#allocation5 + $0xb0] sm:$0xff]
        %v297 = vld [vmem:[#allocation5 + $0xb8] sm:$0xff]
        %v298 = vld [vmem:[#allocation5 + $0xc0] sm:$0xff]
        %v299 = vld [vmem:[#allocation5 + $0xc8] sm:$0xff]
        %v300 = vld [vmem:[#allocation5 + $0xd0] sm:$0xff]
        %v301 = vld [vmem:[#allocation5 + $0xd8] sm:$0xff]
        %v302 = vld [vmem:[#allocation5 + $0xe0] sm:$0xff]
        %v303 = vld [vmem:[#allocation5 + $0xe8] sm:$0xff]
        %v304 = vld [vmem:[#allocation5 + $0xf0] sm:$0xff]
        %v305 = vld [vmem:[#allocation5 + $0xf8] sm:$0xff]
        %v306 = vld [vmem:[%s2] sm:$0x3]
        %v307 = vld [vmem:[#allocation7] sm:$0xff]
        %v308 = vld [vmem:[#allocation7 + $0x8] sm:$0xff]
        %v309 = vld [vmem:[#allocation7 + $0x10] sm:$0xff]
        %v310 = vld [vmem:[#allocation7 + $0x18] sm:$0xff]
        %v311 = vld [vmem:[#allocation7 + $0x20] sm:$0xff]
        %v312 = vld [vmem:[#allocation7 + $0x28] sm:$0xff]
        %v313 = vld [vmem:[#allocation7 + $0x30] sm:$0xff]
        %v314 = vld [vmem:[#allocation7 + $0x38] sm:$0xff]
        %v315 = vld [vmem:[#allocation7 + $0x40] sm:$0xff]
        %v316 = vld [vmem:[#allocation7 + $0x48] sm:$0xff]
        %v317 = vld [vmem:[#allocation7 + $0x50] sm:$0xff]
        %v318 = vld [vmem:[#allocation7 + $0x58] sm:$0xff]
        %v319 = vld [vmem:[#allocation7 + $0x60] sm:$0xff]
        %v320 = vld [vmem:[#allocation7 + $0x68] sm:$0xff]
        %v321 = vld [vmem:[#allocation7 + $0x70] sm:$0xff]
        %v322 = vld [vmem:[#allocation7 + $0x78] sm:$0xff]
        %v323 = vld [vmem:[#allocation7 + $0x80] sm:$0xff]
        %v324 = vld [vmem:[#allocation7 + $0x88] sm:$0xff]
        %v325 = vld [vmem:[#allocation7 + $0x90] sm:$0xff]
        %v326 = vld [vmem:[#allocation7 + $0x98] sm:$0xff]
        %v327 = vld [vmem:[#allocation7 + $0xa0] sm:$0xff]
        %v328 = vld [vmem:[#allocation7 + $0xa8] sm:$0xff]
        %v329 = vld [vmem:[#allocation7 + $0xb0] sm:$0xff]
        %v330 = vld [vmem:[#allocation7 + $0xb8] sm:$0xff]
        %v331 = vld [vmem:[#allocation7 + $0xc0] sm:$0xff]
        %v332 = vld [vmem:[#allocation7 + $0xc8] sm:$0xff]
        %v333 = vld [vmem:[#allocation7 + $0xd0] sm:$0xff]
        %v334 = vld [vmem:[#allocation7 + $0xd8] sm:$0xff]
        %v335 = vld [vmem:[#allocation7 + $0xe0] sm:$0xff]
        %v336 = vld [vmem:[#allocation7 + $0xe8] sm:$0xff]
        %v337 = vld [vmem:[#allocation7 + $0xf0] sm:$0xff]
        %v338 = vld [vmem:[#allocation7 + $0xf8] sm:$0xff]
        %v339 = vld [vmem:[#allocation7 + $0x100] sm:$0xff]
        %v340 = vld [vmem:[#allocation7 + $0x108] sm:$0xff]
        %v341 = vld [vmem:[#allocation7 + $0x110] sm:$0xff]
        %v342 = vld [vmem:[#allocation7 + $0x118] sm:$0xff]
        %v343 = vld [vmem:[#allocation7 + $0x120] sm:$0xff]
        %v344 = vld [vmem:[#allocation7 + $0x128] sm:$0xff]
        %v345 = vld [vmem:[#allocation7 + $0x130] sm:$0xff]
        %v346 = vld [vmem:[#allocation7 + $0x138] sm:$0xff]
        %v347 = vld [vmem:[#allocation7 + $0x140] sm:$0xff]
        %v348 = vld [vmem:[#allocation7 + $0x148] sm:$0xff]
        %v349 = vld [vmem:[#allocation7 + $0x150] sm:$0xff]
        %v350 = vld [vmem:[#allocation7 + $0x158] sm:$0xff]
        %v351 = vld [vmem:[#allocation7 + $0x160] sm:$0xff]
        %v352 = vld [vmem:[#allocation7 + $0x168] sm:$0xff]
        %v353 = vld [vmem:[#allocation7 + $0x170] sm:$0xff]
        %v354 = vld [vmem:[#allocation7 + $0x178] sm:$0xff]
        %v355 = vld [vmem:[#allocation7 + $0x180] sm:$0xff]
        %v356 = vld [vmem:[#allocation7 + $0x188] sm:$0xff]
        %v357 = vld [vmem:[#allocation7 + $0x190] sm:$0xff]
        %v358 = vld [vmem:[#allocation7 + $0x198] sm:$0xff]
        %v359 = vld [vmem:[#allocation7 + $0x1a0] sm:$0xff]
        %v360 = vld [vmem:[#allocation7 + $0x1a8] sm:$0xff]
        %v361 = vld [vmem:[#allocation7 + $0x1b0] sm:$0xff]
        %v362 = vld [vmem:[#allocation7 + $0x1b8] sm:$0xff]
        %v363 = vld [vmem:[#allocation7 + $0x1c0] sm:$0xff]
        %v364 = vld [vmem:[#allocation7 + $0x1c8] sm:$0xff]
        %v365 = vld [vmem:[#allocation7 + $0x1d0] sm:$0xff]
        %v366 = vld [vmem:[#allocation7 + $0x1d8] sm:$0xff]
        %v367 = vld [vmem:[#allocation7 + $0x1e0] sm:$0xff]
        %v368 = vld [vmem:[#allocation7 + $0x1e8] sm:$0xff]
        %v369 = vld [vmem:[#allocation7 + $0x1f0] sm:$0xff]
        %v370 = vld [vmem:[#allocation7 + $0x1f8] sm:$0xff]
        %v371 = vld [vmem:[%s4] sm:$0x3]
        %v372 = vld [vmem:[%s237] sm:$0xff]
        %v373 = vld [vmem:[%s237 + $0x8] sm:$0xff]
        %v375 = vlaneseq
        %v376 = vshrl.u32 %v375, 7
        %v377 = vsub.s32 0, %v376
        %v378 = vrot.slane %v306, %v377
        %v379 = vlaneseq
        %v380 = vshrl.u32 %v379, 7
        %v381 = vsub.s32 1, %v380
        %v382 = vrot.slane %v306, %v381
        %385 = vmatprep.subr.mxu0 %v305
        %386 = vmatpush1.msra.mxu0 %v304
        %387 = vmatprep.subr.mxu0 %v303
        %388 = vmatpush1.msra.mxu0 %v302
        %389 = vmatprep.subr.mxu0 %v301
        %390 = vmatpush1.msra.mxu0 %v300
        %391 = vmatprep.subr.mxu0 %v299
        %392 = vmatpush1.msra.mxu0 %v298
        %393 = vmatprep.subr.mxu0 %v297
        %394 = vmatpush1.msra.mxu0 %v296
        %395 = vmatprep.subr.mxu0 %v295
        %396 = vmatpush1.msra.mxu0 %v294
        %397 = vmatprep.subr.mxu0 %v293
        %398 = vmatpush1.msra.mxu0 %v292
        %399 = vmatprep.subr.mxu0 %v291
        %400 = vmatpush1.msra.mxu0 %v290
        %401 = vmatprep.subr.mxu0 %v289
        %402 = vmatpush1.msra.mxu0 %v288
        %403 = vmatprep.subr.mxu0 %v287
        %404 = vmatpush1.msra.mxu0 %v286
        %405 = vmatprep.subr.mxu0 %v285
        %406 = vmatpush1.msra.mxu0 %v284
        %407 = vmatprep.subr.mxu0 %v283
        %408 = vmatpush1.msra.mxu0 %v282
        %409 = vmatprep.subr.mxu0 %v281
        %410 = vmatpush1.msra.mxu0 %v280
        %411 = vmatprep.subr.mxu0 %v279
        %412 = vmatpush1.msra.mxu0 %v278
        %413 = vmatprep.subr.mxu0 %v277
        %414 = vmatpush1.msra.mxu0 %v276
        %415 = vmatprep.subr.mxu0 %v275
        %416 = vmatpush1.msra.mxu0 %v274
        %417 = vmatprep.subr.mxu0 0.0
        %418 = vmatpush2.msra.mxu0 0.0
        %419 = vmatprep.subr.mxu0 0.0
        %420 = vmatpush2.msra.mxu0 0.0
        %421 = vmatprep.subr.mxu0 0.0
        %422 = vmatpush2.msra.mxu0 0.0
        %423 = vmatprep.subr.mxu0 0.0
        %424 = vmatpush2.msra.mxu0 0.0
        %425 = vmatprep.subr.mxu0 0.0
        %426 = vmatpush2.msra.mxu0 0.0
        %427 = vmatprep.subr.mxu0 0.0
        %428 = vmatpush2.msra.mxu0 0.0
        %429 = vmatprep.subr.mxu0 0.0
        %430 = vmatpush2.msra.mxu0 0.0
        %431 = vmatprep.subr.mxu0 0.0
        %432 = vmatpush2.msra.mxu0 0.0
        %433 = vmatprep.subr.mxu0 0.0
        %434 = vmatpush2.msra.mxu0 0.0
        %435 = vmatprep.subr.mxu0 0.0
        %436 = vmatpush2.msra.mxu0 0.0
        %437 = vmatprep.subr.mxu0 0.0
        %438 = vmatpush2.msra.mxu0 0.0
        %439 = vmatprep.subr.mxu0 0.0
        %440 = vmatpush2.msra.mxu0 0.0
        %441 = vmatprep.subr.mxu0 0.0
        %442 = vmatpush2.msra.mxu0 0.0
        %443 = vmatprep.subr.mxu0 0.0
        %444 = vmatpush2.msra.mxu0 0.0
        %445 = vmatprep.subr.mxu0 0.0
        %446 = vmatpush2.msra.mxu0 0.0
        %447 = vmatprep.subr.mxu0 0.0
        %448 = vmatpush2.msra.mxu0 0.0
        %449 = vmatprep.mubr.f32.mxu0 0.0
        %450 = vmatmul.mubr.f32.gmra.mxu0 %v372
        %v451 = vpop.f32.mrf.mxu0
        %v452 = vadd.f32 %v378, %v451
        %v453 = vpop.f32.mrf.mxu0
        %v454 = vadd.f32 %v382, %v453
        %455 = vmatprep.mubr.f32.mxu0 0.0
        %456 = vmatmul.mubr.f32.gmra.mxu0 %v373
        %v457 = vpop.f32.mrf.mxu0
        %v458 = vadd.f32 %v378, %v457
        %v459 = vpop.f32.mrf.mxu0
        %v460 = vadd.f32 %v382, %v459
        %461 = vdwg.mxu0
        %v462 = vmax.f32 %v452, 0.0
        %v463 = vmax.f32 %v454, 0.0
        %v464 = vmax.f32 %v458, 0.0
        %v465 = vmax.f32 %v460, 0.0
        %v467 = vlaneseq
        %v468 = vshrl.u32 %v467, 7
        %v469 = vsub.s32 0, %v468
        %v470 = vrot.slane %v371, %v469
        %v471 = vlaneseq
        %v472 = vshrl.u32 %v471, 7
        %v473 = vsub.s32 1, %v472
        %v474 = vrot.slane %v371, %v473
        %477 = vmatprep.subr.mxu0 %v338
        %478 = vmatpush1.msra.mxu0 %v337
        %479 = vmatprep.subr.mxu0 %v336
        %480 = vmatpush1.msra.mxu0 %v335
        %481 = vmatprep.subr.mxu0 %v334
        %482 = vmatpush1.msra.mxu0 %v333
        %483 = vmatprep.subr.mxu0 %v332
        %484 = vmatpush1.msra.mxu0 %v331
        %485 = vmatprep.subr.mxu0 %v330
        %486 = vmatpush1.msra.mxu0 %v329
        %487 = vmatprep.subr.mxu0 %v328
        %488 = vmatpush1.msra.mxu0 %v327
        %489 = vmatprep.subr.mxu0 %v326
        %490 = vmatpush1.msra.mxu0 %v325
        %491 = vmatprep.subr.mxu0 %v324
        %492 = vmatpush1.msra.mxu0 %v323
        %493 = vmatprep.subr.mxu0 %v322
        %494 = vmatpush1.msra.mxu0 %v321
        %495 = vmatprep.subr.mxu0 %v320
        %496 = vmatpush1.msra.mxu0 %v319
        %497 = vmatprep.subr.mxu0 %v318
        %498 = vmatpush1.msra.mxu0 %v317
        %499 = vmatprep.subr.mxu0 %v316
        %500 = vmatpush1.msra.mxu0 %v315
        %501 = vmatprep.subr.mxu0 %v314
        %502 = vmatpush1.msra.mxu0 %v313
        %503 = vmatprep.subr.mxu0 %v312
        %504 = vmatpush1.msra.mxu0 %v311
        %505 = vmatprep.subr.mxu0 %v310
        %506 = vmatpush1.msra.mxu0 %v309
        %507 = vmatprep.subr.mxu0 %v308
        %508 = vmatpush1.msra.mxu0 %v307
        %509 = vmatprep.subr.mxu0 %v370
        %510 = vmatpush2.msra.mxu0 %v369
        %511 = vmatprep.subr.mxu0 %v368
        %512 = vmatpush2.msra.mxu0 %v367
        %513 = vmatprep.subr.mxu0 %v366
        %514 = vmatpush2.msra.mxu0 %v365
        %515 = vmatprep.subr.mxu0 %v364
        %516 = vmatpush2.msra.mxu0 %v363
        %517 = vmatprep.subr.mxu0 %v362
        %518 = vmatpush2.msra.mxu0 %v361
        %519 = vmatprep.subr.mxu0 %v360
        %520 = vmatpush2.msra.mxu0 %v359
        %521 = vmatprep.subr.mxu0 %v358
        %522 = vmatpush2.msra.mxu0 %v357
        %523 = vmatprep.subr.mxu0 %v356
        %524 = vmatpush2.msra.mxu0 %v355
        %525 = vmatprep.subr.mxu0 %v354
        %526 = vmatpush2.msra.mxu0 %v353
        %527 = vmatprep.subr.mxu0 %v352
        %528 = vmatpush2.msra.mxu0 %v351
        %529 = vmatprep.subr.mxu0 %v350
        %530 = vmatpush2.msra.mxu0 %v349
        %531 = vmatprep.subr.mxu0 %v348
        %532 = vmatpush2.msra.mxu0 %v347
        %533 = vmatprep.subr.mxu0 %v346
        %534 = vmatpush2.msra.mxu0 %v345
        %535 = vmatprep.subr.mxu0 %v344
        %536 = vmatpush2.msra.mxu0 %v343
        %537 = vmatprep.subr.mxu0 %v342
        %538 = vmatpush2.msra.mxu0 %v341
        %539 = vmatprep.subr.mxu0 %v340
        %540 = vmatpush2.msra.mxu0 %v339
        %541 = vmatprep.mubr.f32.mxu0 %v463
        %542 = vmatmul.mubr.f32.gmra.mxu0 %v462
        %v543 = vpop.f32.mrf.mxu0
        %v544 = vadd.f32 %v470, %v543
        %v545 = vpop.f32.mrf.mxu0
        %v546 = vadd.f32 %v474, %v545
        %547 = vmatprep.mubr.f32.mxu0 %v465
        %548 = vmatmul.mubr.f32.gmra.mxu0 %v464
        %v549 = vpop.f32.mrf.mxu0
        %v550 = vadd.f32 %v470, %v549
        %v551 = vpop.f32.mrf.mxu0
        %v552 = vadd.f32 %v474, %v551
        %553 = vdwg.mxu0
        %554 = vst [vmem:[%s271] sm:$0xff] %v544
        %555 = vst [vmem:[%s271 + $0x8] sm:$0xff] %v546
        %556 = vst [vmem:[%s271 + $0x10] sm:$0xff] %v550
        %557 = vst [vmem:[%s271 + $0x18] sm:$0xff] %v552
        %s558 = sand.u32 %s141, 1
        %s559 = scalar_lea.sflag [#allocation4], %s558
        %s560 = sand.u32 %s141, 1
        %s561 = smul.addr %s560, 32
        %s562 = scalar_lea.vmem [#allocation8], %s561
        // Predicated region
        $region53: #{tpu_custom_call.1} parent=39 // pred_check
          %p563 = pneg %p151
        $region54: #{tpu_custom_call.1} parent=39 // pred_check_branch
          %565 = sbr.rel (%p563) target = $region56
        $region55: #{tpu_custom_call.1} parent=39 // pred_region
          %s566 = smul.u32 2, %s23
          %s568 = ssub.s32 512, 512
          %569 = vsyncadd %s559, %s568
          %s570 = smul.addr %s566, 2
          %s571 = smul.addr %s570, 128
          %s572 = scalar_lea.hbm %s5, %s571
          %s573 = sshll.u32 %s562, 4
          %s574 = int_to_ptr.vmem [resolvable:$true] %s573
          %579 = dma.vmem_to_hbm [thread:$0]  %s574, 512, %s572, %s559, 256, 256, 16
        $region56: #{tpu_custom_call.1} parent=39 // pred_fallthru
          _
      $region40: #{tpu_custom_call.1} parent=5 // pred_fallthru
        _
      %p580 = scmp.le.s32.totalorder 2, %s18
      // Predicated region
      $region57: #{tpu_custom_call.1} parent=5 // pred_check
        %p581 = pneg %p580
      $region58: #{tpu_custom_call.1} parent=5 // pred_check_branch
        %583 = sbr.rel (%p581) target = $region60
      $region59: #{tpu_custom_call.1} parent=5 // pred_region
        %s584 = ssub.s32 %s18, 2
        // Predicated region
        $region61: #{tpu_custom_call.1} parent=59 // pred_check
          %p585 = pneg %p157
        $region62: #{tpu_custom_call.1} parent=59 // pred_check_branch
          %587 = sbr.rel (%p585) target = $region64
        $region63: #{tpu_custom_call.1} parent=59 // pred_region
          %s588 = sand.u32 %s142, 1
          %s589 = scalar_lea.sflag [#allocation4], %s588
          %s590 = sand.u32 %s142, 1
          %s591 = smul.addr %s590, 32
          %s592 = scalar_lea.vmem [#allocation8], %s591
          %593 = dma.done %s589, 512
        $region64: #{tpu_custom_call.1} parent=59 // pred_fallthru
          _
      $region60: #{tpu_custom_call.1} parent=5 // pred_fallthru
        _
    $region6: #{tpu_custom_call.1} parent=1 // loop_footer
      %s22 = sadd.s32 1, %s18
    $region7: #{tpu_custom_call.1} parent=1 // loop_footer_branch
      %17 = sbr.rel target = $region3
    $region8: #{tpu_custom_call.1} parent=1 // loop_exit
      _
    %594 = vsyncpa [#allocation3], 1
    %s595 = scalar_lea.sflag [#allocation3], 1
    %596 = vsyncpa %s595, 1
    %597 = vsyncpa [#allocation6], 1
    %598 = vsyncpa [#allocation4], 1
    %s599 = scalar_lea.sflag [#allocation4], 1
    %600 = vsyncpa %s599, 1

// kernel: tpu_custom_call.1
$region0: #{tpu_custom_call.1}
  #allocation0 [shape = 'u32[]', space=smem, size = 0x4, offset = 0x4, fixed_abs, tag = 'smem constant byte address 0x4 - core index']
  #allocation1 [shape = 'u32[144,128]{1,0:T(1,128)}', space=vmem, size = 0x12000, scoped, tag = 'internal scratch']
  %s0 = inlined_call_operand.hbm [shape: f32[32,128], index: 0, kind: input, shape index: {}]
  %s1 = inlined_call_operand.hbm [shape: f32[128,256], index: 1, kind: input, shape index: {}]
  %s2 = inlined_call_operand.vmem [shape: f32[1,256], index: 2, kind: input, shape index: {}]
  %s3 = inlined_call_operand.hbm [shape: f32[256,256], index: 3, kind: input, shape index: {}]
  %s4 = inlined_call_operand.vmem [shape: f32[1,256], index: 4, kind: input, shape index: {}]
  %s5 = inlined_call_operand.hbm [shape: f32[32,256], index: 5, kind: output, shape index: {}]
  %s6 = sld [smem:[#allocation0]]
  $region65: #{tpu_custom_call.1} parent=0
    _
  %s8 = ssub.s32 1, %s6
  %s9 = scalar_select 0, %s8, %s6
  $region1: #{tpu_custom_call.1} parent=0
    #allocation2 [shape = 'u8[16384]{0}', space=vmem, size = 0x4000, scoped, tag = 'input window, operand 0']
    #allocation3 [shape = 's32[2]{0}', space=sflag, size = 0x8, scoped, tag = 'scoped memory for tpu_custom_call.1']
    #allocation4 [shape = 's32[2]{0}', space=sflag, size = 0x8, scoped, tag = 'scoped memory for tpu_custom_call.1']
    #allocation5 [shape = 'u8[131072]{0}', space=vmem, size = 0x20000, scoped, tag = 'input window, operand 1, single buffered']
    #allocation6 [shape = 's32[1]{0}', space=sflag, size = 0x4, scoped, tag = 'scoped memory for tpu_custom_call.1']
    #allocation7 [shape = 'u8[262144]{0}', space=vmem, size = 0x40000, scoped, tag = 'input window, operand 3, single buffered']
    #allocation8 [shape = 'u8[32768]{0}', space=vmem, size = 0x8000, scoped, tag = 'output window, operand 0']
    %10 = vsyncpa [#allocation3], 0
    %s11 = scalar_lea.sflag [#allocation3], 1
    %12 = vsyncpa %s11, 0
    %13 = vsyncpa [#allocation6], 0
    %14 = vsyncpa [#allocation4], 0
    %s15 = scalar_lea.sflag [#allocation4], 1
    %16 = vsyncpa %s15, 0
    loop: start=0, step=1, limit=4
    $region2: #{tpu_custom_call.1} parent=1 // loop_pre_header
      _
    $region3: #{tpu_custom_call.1} parent=1 // loop_header
      %s18 = sphi 0, %s22
      %p19 = scmp.ge.s32.totalorder %s18, 4
      %s28 = sphi 0, %s30
      %s31 = sphi 0, %s28
      %s32 = sphi 0, %s31
      %s48 = sphi 0, %s32
      %s52 = sphi 0, %s52
      %s54 = sphi 0, %s52
      %s55 = sphi 0, %s54
      %s69 = sphi 0, %s55
      %s73 = sphi 0, %s73
      %s75 = sphi 0, %s73
      %s76 = sphi 0, %s75
      %s90 = sphi 0, %s76
      %s94 = sphi 0, %s94
      %s96 = sphi 0, %s94
      %s97 = sphi 0, %s96
      %s111 = sphi 0, %s97
      %s115 = sphi 0, %s115
      %s117 = sphi 0, %s115
      %s118 = sphi 0, %s117
      %s132 = sphi 0, %s118
      %s138 = sphi 0, %s140
      %s141 = sphi 0, %s138
      %s142 = sphi 0, %s141
      %s158 = sphi 0, %s142
    $region4: #{tpu_custom_call.1} parent=1 // loop_header_branch
      %21 = sbr.rel (%p19) target = $region8
    $region5: #{tpu_custom_call.1} parent=1 // loop_body
      %s23 = ssub.s32 %s18, 1
      %s24 = ssub.s32 %s18, 2
      %s25 = sadd.s32 %s18, 1
      %s26 = ssub.s32 %s18, %s25
      %p27 = scmp.eq.s32.totalorder %s26, 0
      %s29 = sadd.s32 %s28, 1
      %s30 = scalar_select %p27, %s28, %s29
      %p33 = pneg %p27
      %p34 = scmp.eq.s32.totalorder %s18, 1
      %p35 = por %p33, %p34
      %p36 = scmp.ne.s32.totalorder %s28, %s31
      %p37 = scmp.eq.s32.totalorder %s18, 0
      %p38 = por %p36, %p37
      %p39 = scmp.ne.s32.totalorder %s28, %s31
      %p40 = scmp.eq.s32.totalorder %s23, 1
      %p41 = por %p39, %p40
      %p42 = scmp.ne.s32.totalorder %s31, %s32
      %p43 = scmp.eq.s32.totalorder %s23, 0
      %p44 = por %p42, %p43
      %p45 = scmp.ne.s32.totalorder %s31, %s32
      %p46 = scmp.eq.s32.totalorder %s24, 1
      %p47 = por %p45, %p46
      %p49 = scmp.ne.s32.totalorder %s32, %s48
      %p50 = scmp.eq.s32.totalorder %s24, 0
      %p51 = por %p49, %p50
      %s53 = sadd.s32 %s52, 1
      %p56 = scmp.eq.s32.totalorder %s18, 1
      %p57 = scmp.ne.s32.totalorder %s52, %s54
      %p58 = scmp.eq.s32.totalorder %s18, 0
      %p59 = por %p57, %p58
      %p60 = scmp.ne.s32.totalorder %s52, %s54
      %p61 = scmp.eq.s32.totalorder %s23, 1
      %p62 = por %p60, %p61
      %p63 = scmp.ne.s32.totalorder %s54, %s55
      %p64 = scmp.eq.s32.totalorder %s23, 0
      %p65 = por %p63, %p64
      %p66 = scmp.ne.s32.totalorder %s54, %s55
      %p67 = scmp.eq.s32.totalorder %s24, 1
      %p68 = por %p66, %p67
      %p70 = scmp.ne.s32.totalorder %s55, %s69
      %p71 = scmp.eq.s32.totalorder %s24, 0
      %p72 = por %p70, %p71
      %s74 = sadd.s32 %s73, 1
      %p77 = scmp.eq.s32.totalorder %s18, 1
      %p78 = scmp.ne.s32.totalorder %s73, %s75
      %p79 = scmp.eq.s32.totalorder %s18, 0
      %p80 = por %p78, %p79
      %p81 = scmp.ne.s32.totalorder %s73, %s75
      %p82 = scmp.eq.s32.totalorder %s23, 1
      %p83 = por %p81, %p82
      %p84 = scmp.ne.s32.totalorder %s75, %s76
      %p85 = scmp.eq.s32.totalorder %s23, 0
      %p86 = por %p84, %p85
      %p87 = scmp.ne.s32.totalorder %s75, %s76
      %p88 = scmp.eq.s32.totalorder %s24, 1
      %p89 = por %p87, %p88
      %p91 = scmp.ne.s32.totalorder %s76, %s90
      %p92 = scmp.eq.s32.totalorder %s24, 0
      %p93 = por %p91, %p92
      %s95 = sadd.s32 %s94, 1
      %p98 = scmp.eq.s32.totalorder %s18, 1
      %p99 = scmp.ne.s32.totalorder %s94, %s96
      %p100 = scmp.eq.s32.totalorder %s18, 0
      %p101 = por %p99, %p100
      %p102 = scmp.ne.s32.totalorder %s94, %s96
      %p103 = scmp.eq.s32.totalorder %s23, 1
      %p104 = por %p102, %p103
      %p105 = scmp.ne.s32.totalorder %s96, %s97
      %p106 = scmp.eq.s32.totalorder %s23, 0
      %p107 = por %p105, %p106
      %p108 = scmp.ne.s32.totalorder %s96, %s97
      %p109 = scmp.eq.s32.totalorder %s24, 1
      %p110 = por %p108, %p109
      %p112 = scmp.ne.s32.totalorder %s97, %s111
      %p113 = scmp.eq.s32.totalorder %s24, 0
      %p114 = por %p112, %p113
      %s116 = sadd.s32 %s115, 1
      %p119 = scmp.eq.s32.totalorder %s18, 1
      %p120 = scmp.ne.s32.totalorder %s115, %s117
      %p121 = scmp.eq.s32.totalorder %s18, 0
      %p122 = por %p120, %p121
      %p123 = scmp.ne.s32.totalorder %s115, %s117
      %p124 = scmp.eq.s32.totalorder %s23, 1
      %p125 = por %p123, %p124
      %p126 = scmp.ne.s32.totalorder %s117, %s118
      %p127 = scmp.eq.s32.totalorder %s23, 0
      %p128 = por %p126, %p127
      %p129 = scmp.ne.s32.totalorder %s117, %s118
      %p130 = scmp.eq.s32.totalorder %s24, 1
      %p131 = por %p129, %p130
      %p133 = scmp.ne.s32.totalorder %s118, %s132
      %p134 = scmp.eq.s32.totalorder %s24, 0
      %p135 = por %p133, %p134
      %s136 = ssub.s32 %s18, %s25
      %p137 = scmp.eq.s32.totalorder %s136, 0
      %s139 = sadd.s32 %s138, 1
      %s140 = scalar_select %p137, %s138, %s139
      %p143 = pneg %p137
      %p144 = scmp.eq.s32.totalorder %s18, 1
      %p145 = por %p143, %p144
      %p146 = scmp.ne.s32.totalorder %s138, %s141
      %p147 = scmp.eq.s32.totalorder %s18, 0
      %p148 = por %p146, %p147
      %p149 = scmp.ne.s32.totalorder %s138, %s141
      %p150 = scmp.eq.s32.totalorder %s23, 1
      %p151 = por %p149, %p150
      %p152 = scmp.ne.s32.totalorder %s141, %s142
      %p153 = scmp.eq.s32.totalorder %s23, 0
      %p154 = por %p152, %p153
      %p155 = scmp.ne.s32.totalorder %s141, %s142
      %p156 = scmp.eq.s32.totalorder %s24, 1
      %p157 = por %p155, %p156
      %p159 = scmp.ne.s32.totalorder %s142, %s158
      %p160 = scmp.eq.s32.totalorder %s24, 0
      %p161 = por %p159, %p160
      %p162 = scmp.le.s32.totalorder 1, %s18
      %p163 = scmp.lt.s32.totalorder %s18, 3
      %p164 = pnand %p162, %p163
      %p165 = pneg %p164
      // Predicated region
      $region9: #{tpu_custom_call.1} parent=5 // pred_check
        _
      $region10: #{tpu_custom_call.1} parent=5 // pred_check_branch
        %167 = sbr.rel (%p164) target = $region12
      $region11: #{tpu_custom_call.1} parent=5 // pred_region
        %s168 = ssub.s32 %s18, 1
        // Predicated region
        $region13: #{tpu_custom_call.1} parent=11 // pred_check
          %p169 = pneg %p65
        $region14: #{tpu_custom_call.1} parent=11 // pred_check_branch
          %171 = sbr.rel (%p169) target = $region16
        $region15: #{tpu_custom_call.1} parent=11 // pred_region
          %s173 = ssub.s32 4096, 4096
          %174 = vsyncadd [#allocation6], %s173
          %s175 = sshll.u32 [#allocation5], 4
          %s176 = int_to_ptr.vmem [resolvable:$true] %s175
          %181 = dma.hbm_to_vmem [thread:$0]  %s1, 4096, %s176, [#allocation6], 256, 256, 16
        $region16: #{tpu_custom_call.1} parent=11 // pred_fallthru
          _
        // Predicated region
        $region17: #{tpu_custom_call.1} parent=11 // pred_check
          %p182 = pneg %p86
        $region18: #{tpu_custom_call.1} parent=11 // pred_check_branch
          %184 = sbr.rel (%p182) target = $region20
        $region19: #{tpu_custom_call.1} parent=11 // pred_region
          _
        $region20: #{tpu_custom_call.1} parent=11 // pred_fallthru
          _
        // Predicated region
        $region21: #{tpu_custom_call.1} parent=11 // pred_check
          %p185 = pneg %p107
        $region22: #{tpu_custom_call.1} parent=11 // pred_check_branch
          %187 = sbr.rel (%p185) target = $region24
        $region23: #{tpu_custom_call.1} parent=11 // pred_region
          %s189 = ssub.s32 8192, 8192
          %190 = vsyncadd [#allocation6], %s189
          %s191 = sshll.u32 [#allocation7], 4
          %s192 = int_to_ptr.vmem [resolvable:$true] %s191
          %197 = dma.hbm_to_vmem [thread:$0]  %s3, 8192, %s192, [#allocation6], 256, 256, 16
        $region24: #{tpu_custom_call.1} parent=11 // pred_fallthru
          _
        // Predicated region
        $region25: #{tpu_custom_call.1} parent=11 // pred_check
          %p198 = pneg %p128
        $region26: #{tpu_custom_call.1} parent=11 // pred_check_branch
          %200 = sbr.rel (%p198) target = $region28
        $region27: #{tpu_custom_call.1} parent=11 // pred_region
          _
        $region28: #{tpu_custom_call.1} parent=11 // pred_fallthru
          _
      $region12: #{tpu_custom_call.1} parent=5 // pred_fallthru
        _
      %p201 = scmp.lt.s32.totalorder %s18, 2
      // Predicated region
      $region29: #{tpu_custom_call.1} parent=5 // pred_check
        %p202 = pneg %p201
      $region30: #{tpu_custom_call.1} parent=5 // pred_check_branch
        %204 = sbr.rel (%p202) target = $region32
      $region31: #{tpu_custom_call.1} parent=5 // pred_region
        // Predicated region
        $region33: #{tpu_custom_call.1} parent=31 // pred_check
          %p205 = pneg %p38
        $region34: #{tpu_custom_call.1} parent=31 // pred_check_branch
          %207 = sbr.rel (%p205) target = $region36
        $region35: #{tpu_custom_call.1} parent=31 // pred_region
          %s208 = sand.u32 %s28, 1
          %s209 = scalar_lea.sflag [#allocation3], %s208
          %s210 = sand.u32 %s28, 1
          %s211 = smul.addr %s210, 16
          %s212 = scalar_lea.vmem [#allocation2], %s211
          %s213 = smul.u32 2, %s18
          %s215 = ssub.s32 256, 256
          %216 = vsyncadd %s209, %s215
          %s217 = smul.addr %s213, 128
          %s218 = scalar_lea.hbm %s0, %s217
          %s219 = sshll.u32 %s212, 4
          %s220 = int_to_ptr.vmem [resolvable:$true] %s219
          %225 = dma.hbm_to_vmem [thread:$0]  %s218, 256, %s220, %s209, 128, 128, 8
        $region36: #{tpu_custom_call.1} parent=31 // pred_fallthru
          _
      $region32: #{tpu_custom_call.1} parent=5 // pred_fallthru
        _
      %p226 = scmp.le.s32.totalorder 1, %s18
      %p227 = scmp.lt.s32.totalorder %s18, 3
      %p228 = pnand %p226, %p227
      %p229 = pneg %p228
      // Predicated region
      $region37: #{tpu_custom_call.1} parent=5 // pred_check
        _
      $region38: #{tpu_custom_call.1} parent=5 // pred_check_branch
        %231 = sbr.rel (%p228) target = $region40
      $region39: #{tpu_custom_call.1} parent=5 // pred_region
        %s232 = ssub.s32 %s18, 1
        %s233 = sand.u32 %s31, 1
        %s234 = scalar_lea.sflag [#allocation3], %s233
        %s235 = sand.u32 %s31, 1
        %s236 = smul.addr %s235, 16
        %s237 = scalar_lea.vmem [#allocation2], %s236
        // Predicated region
        $region41: #{tpu_custom_call.1} parent=39 // pred_check
          %p238 = pneg %p44
        $region42: #{tpu_custom_call.1} parent=39 // pred_check_branch
          %240 = sbr.rel (%p238) target = $region44
        $region43: #{tpu_custom_call.1} parent=39 // pred_region
          %241 = dma.done %s234, 256
        $region44: #{tpu_custom_call.1} parent=39 // pred_fallthru
          _
        // Predicated region
        $region45: #{tpu_custom_call.1} parent=39 // pred_check
          %p242 = pneg %p65
        $region46: #{tpu_custom_call.1} parent=39 // pred_check_branch
          %244 = sbr.rel (%p242) target = $region48
        $region47: #{tpu_custom_call.1} parent=39 // pred_region
          %245 = dma.done [#allocation6], 4096
        $region48: #{tpu_custom_call.1} parent=39 // pred_fallthru
          _
        // Predicated region
        $region49: #{tpu_custom_call.1} parent=39 // pred_check
          %p246 = pneg %p107
        $region50: #{tpu_custom_call.1} parent=39 // pred_check_branch
          %248 = sbr.rel (%p246) target = $region52
        $region51: #{tpu_custom_call.1} parent=39 // pred_region
          %249 = dma.done [#allocation6], 8192
        $region52: #{tpu_custom_call.1} parent=39 // pred_fallthru
          _
        %s250 = sand.u32 %s31, 1
        %s251 = scalar_lea.sflag [#allocation3], %s250
        %s252 = sand.u32 %s31, 1
        %s253 = smul.addr %s252, 16
        %s254 = scalar_lea.vmem [#allocation2], %s253
        %p255 = pneg %p44
        %p256 = pneg %p41
        %p257 = pneg %p65
        %p258 = pneg %p62
        %p259 = pneg %p86
        %p260 = pneg %p83
        %p261 = pneg %p107
        %p262 = pneg %p104
        %p263 = pneg %p128
        %p264 = pneg %p125
        %p265 = pneg %p154
        %p266 = pneg %p151
        %s267 = sand.u32 %s141, 1
        %s268 = scalar_lea.sflag [#allocation4], %s267
        %s269 = sand.u32 %s141, 1
        %s270 = smul.addr %s269, 32
        %s271 = scalar_lea.vmem [#allocation8], %s270
        %s272 = smul.u32 2, %s23
        %s273 = smul.u32 2, %s23
        %v274 = vld [vmem:[#allocation5] sm:$0xff]
        %v275 = vld [vmem:[#allocation5 + $0x8] sm:$0xff]
        %v276 = vld [vmem:[#allocation5 + $0x10] sm:$0xff]
        %v277 = vld [vmem:[#allocation5 + $0x18] sm:$0xff]
        %v278 = vld [vmem:[#allocation5 + $0x20] sm:$0xff]
        %v279 = vld [vmem:[#allocation5 + $0x28] sm:$0xff]
        %v280 = vld [vmem:[#allocation5 + $0x30] sm:$0xff]
        %v281 = vld [vmem:[#allocation5 + $0x38] sm:$0xff]
        %v282 = vld [vmem:[#allocation5 + $0x40] sm:$0xff]
        %v283 = vld [vmem:[#allocation5 + $0x48] sm:$0xff]
        %v284 = vld [vmem:[#allocation5 + $0x50] sm:$0xff]
        %v285 = vld [vmem:[#allocation5 + $0x58] sm:$0xff]
        %v286 = vld [vmem:[#allocation5 + $0x60] sm:$0xff]
        %v287 = vld [vmem:[#allocation5 + $0x68] sm:$0xff]
        %v288 = vld [vmem:[#allocation5 + $0x70] sm:$0xff]
        %v289 = vld [vmem:[#allocation5 + $0x78] sm:$0xff]
        %v290 = vld [vmem:[#allocation5 + $0x80] sm:$0xff]
        %v291 = vld [vmem:[#allocation5 + $0x88] sm:$0xff]
        %v292 = vld [vmem:[#allocation5 + $0x90] sm:$0xff]
        %v293 = vld [vmem:[#allocation5 + $0x98] sm:$0xff]
        %v294 = vld [vmem:[#allocation5 + $0xa0] sm:$0xff]
        %v295 = vld [vmem:[#allocation5 + $0xa8] sm:$0xff]
        %v296 = vld [vmem:[#allocation5 + $0xb0] sm:$0xff]
        %v297 = vld [vmem:[#allocation5 + $0xb8] sm:$0xff]
        %v298 = vld [vmem:[#allocation5 + $0xc0] sm:$0xff]
        %v299 = vld [vmem:[#allocation5 + $0xc8] sm:$0xff]
        %v300 = vld [vmem:[#allocation5 + $0xd0] sm:$0xff]
        %v301 = vld [vmem:[#allocation5 + $0xd8] sm:$0xff]
        %v302 = vld [vmem:[#allocation5 + $0xe0] sm:$0xff]
        %v303 = vld [vmem:[#allocation5 + $0xe8] sm:$0xff]
        %v304 = vld [vmem:[#allocation5 + $0xf0] sm:$0xff]
        %v305 = vld [vmem:[#allocation5 + $0xf8] sm:$0xff]
        %v306 = vld [vmem:[%s2] sm:$0x3]
        %v307 = vld [vmem:[#allocation7] sm:$0xff]
        %v308 = vld [vmem:[#allocation7 + $0x8] sm:$0xff]
        %v309 = vld [vmem:[#allocation7 + $0x10] sm:$0xff]
        %v310 = vld [vmem:[#allocation7 + $0x18] sm:$0xff]
        %v311 = vld [vmem:[#allocation7 + $0x20] sm:$0xff]
        %v312 = vld [vmem:[#allocation7 + $0x28] sm:$0xff]
        %v313 = vld [vmem:[#allocation7 + $0x30] sm:$0xff]
        %v314 = vld [vmem:[#allocation7 + $0x38] sm:$0xff]
        %v315 = vld [vmem:[#allocation7 + $0x40] sm:$0xff]
        %v316 = vld [vmem:[#allocation7 + $0x48] sm:$0xff]
        %v317 = vld [vmem:[#allocation7 + $0x50] sm:$0xff]
        %v318 = vld [vmem:[#allocation7 + $0x58] sm:$0xff]
        %v319 = vld [vmem:[#allocation7 + $0x60] sm:$0xff]
        %v320 = vld [vmem:[#allocation7 + $0x68] sm:$0xff]
        %v321 = vld [vmem:[#allocation7 + $0x70] sm:$0xff]
        %v322 = vld [vmem:[#allocation7 + $0x78] sm:$0xff]
        %v323 = vld [vmem:[#allocation7 + $0x80] sm:$0xff]
        %v324 = vld [vmem:[#allocation7 + $0x88] sm:$0xff]
        %v325 = vld [vmem:[#allocation7 + $0x90] sm:$0xff]
        %v326 = vld [vmem:[#allocation7 + $0x98] sm:$0xff]
        %v327 = vld [vmem:[#allocation7 + $0xa0] sm:$0xff]
        %v328 = vld [vmem:[#allocation7 + $0xa8] sm:$0xff]
        %v329 = vld [vmem:[#allocation7 + $0xb0] sm:$0xff]
        %v330 = vld [vmem:[#allocation7 + $0xb8] sm:$0xff]
        %v331 = vld [vmem:[#allocation7 + $0xc0] sm:$0xff]
        %v332 = vld [vmem:[#allocation7 + $0xc8] sm:$0xff]
        %v333 = vld [vmem:[#allocation7 + $0xd0] sm:$0xff]
        %v334 = vld [vmem:[#allocation7 + $0xd8] sm:$0xff]
        %v335 = vld [vmem:[#allocation7 + $0xe0] sm:$0xff]
        %v336 = vld [vmem:[#allocation7 + $0xe8] sm:$0xff]
        %v337 = vld [vmem:[#allocation7 + $0xf0] sm:$0xff]
        %v338 = vld [vmem:[#allocation7 + $0xf8] sm:$0xff]
        %v339 = vld [vmem:[#allocation7 + $0x100] sm:$0xff]
        %v340 = vld [vmem:[#allocation7 + $0x108] sm:$0xff]
        %v341 = vld [vmem:[#allocation7 + $0x110] sm:$0xff]
        %v342 = vld [vmem:[#allocation7 + $0x118] sm:$0xff]
        %v343 = vld [vmem:[#allocation7 + $0x120] sm:$0xff]
        %v344 = vld [vmem:[#allocation7 + $0x128] sm:$0xff]
        %v345 = vld [vmem:[#allocation7 + $0x130] sm:$0xff]
        %v346 = vld [vmem:[#allocation7 + $0x138] sm:$0xff]
        %v347 = vld [vmem:[#allocation7 + $0x140] sm:$0xff]
        %v348 = vld [vmem:[#allocation7 + $0x148] sm:$0xff]
        %v349 = vld [vmem:[#allocation7 + $0x150] sm:$0xff]
        %v350 = vld [vmem:[#allocation7 + $0x158] sm:$0xff]
        %v351 = vld [vmem:[#allocation7 + $0x160] sm:$0xff]
        %v352 = vld [vmem:[#allocation7 + $0x168] sm:$0xff]
        %v353 = vld [vmem:[#allocation7 + $0x170] sm:$0xff]
        %v354 = vld [vmem:[#allocation7 + $0x178] sm:$0xff]
        %v355 = vld [vmem:[#allocation7 + $0x180] sm:$0xff]
        %v356 = vld [vmem:[#allocation7 + $0x188] sm:$0xff]
        %v357 = vld [vmem:[#allocation7 + $0x190] sm:$0xff]
        %v358 = vld [vmem:[#allocation7 + $0x198] sm:$0xff]
        %v359 = vld [vmem:[#allocation7 + $0x1a0] sm:$0xff]
        %v360 = vld [vmem:[#allocation7 + $0x1a8] sm:$0xff]
        %v361 = vld [vmem:[#allocation7 + $0x1b0] sm:$0xff]
        %v362 = vld [vmem:[#allocation7 + $0x1b8] sm:$0xff]
        %v363 = vld [vmem:[#allocation7 + $0x1c0] sm:$0xff]
        %v364 = vld [vmem:[#allocation7 + $0x1c8] sm:$0xff]
        %v365 = vld [vmem:[#allocation7 + $0x1d0] sm:$0xff]
        %v366 = vld [vmem:[#allocation7 + $0x1d8] sm:$0xff]
        %v367 = vld [vmem:[#allocation7 + $0x1e0] sm:$0xff]
        %v368 = vld [vmem:[#allocation7 + $0x1e8] sm:$0xff]
        %v369 = vld [vmem:[#allocation7 + $0x1f0] sm:$0xff]
        %v370 = vld [vmem:[#allocation7 + $0x1f8] sm:$0xff]
        %v371 = vld [vmem:[%s4] sm:$0x3]
        %v372 = vld [vmem:[%s237] sm:$0xff]
        %v373 = vld [vmem:[%s237 + $0x8] sm:$0xff]
        %v375 = vlaneseq
        %v376 = vshrl.u32 %v375, 7
        %v377 = vsub.s32 0, %v376
        %v378 = vrot.slane %v306, %v377
        %v379 = vlaneseq
        %v380 = vshrl.u32 %v379, 7
        %v381 = vsub.s32 1, %v380
        %v382 = vrot.slane %v306, %v381
        %385 = vmatprep.subr.mxu0 %v305
        %386 = vmatpush1.msra.mxu0 %v304
        %387 = vmatprep.subr.mxu0 %v303
        %388 = vmatpush1.msra.mxu0 %v302
        %389 = vmatprep.subr.mxu0 %v301
        %390 = vmatpush1.msra.mxu0 %v300
        %391 = vmatprep.subr.mxu0 %v299
        %392 = vmatpush1.msra.mxu0 %v298
        %393 = vmatprep.subr.mxu0 %v297
        %394 = vmatpush1.msra.mxu0 %v296
        %395 = vmatprep.subr.mxu0 %v295
        %396 = vmatpush1.msra.mxu0 %v294
        %397 = vmatprep.subr.mxu0 %v293
        %398 = vmatpush1.msra.mxu0 %v292
        %399 = vmatprep.subr.mxu0 %v291
        %400 = vmatpush1.msra.mxu0 %v290
        %401 = vmatprep.subr.mxu0 %v289
        %402 = vmatpush1.msra.mxu0 %v288
        %403 = vmatprep.subr.mxu0 %v287
        %404 = vmatpush1.msra.mxu0 %v286
        %405 = vmatprep.subr.mxu0 %v285
        %406 = vmatpush1.msra.mxu0 %v284
        %407 = vmatprep.subr.mxu0 %v283
        %408 = vmatpush1.msra.mxu0 %v282
        %409 = vmatprep.subr.mxu0 %v281
        %410 = vmatpush1.msra.mxu0 %v280
        %411 = vmatprep.subr.mxu0 %v279
        %412 = vmatpush1.msra.mxu0 %v278
        %413 = vmatprep.subr.mxu0 %v277
        %414 = vmatpush1.msra.mxu0 %v276
        %415 = vmatprep.subr.mxu0 %v275
        %416 = vmatpush1.msra.mxu0 %v274
        %417 = vmatprep.subr.mxu0 0.0
        %418 = vmatpush2.msra.mxu0 0.0
        %419 = vmatprep.subr.mxu0 0.0
        %420 = vmatpush2.msra.mxu0 0.0
        %421 = vmatprep.subr.mxu0 0.0
        %422 = vmatpush2.msra.mxu0 0.0
        %423 = vmatprep.subr.mxu0 0.0
        %424 = vmatpush2.msra.mxu0 0.0
        %425 = vmatprep.subr.mxu0 0.0
        %426 = vmatpush2.msra.mxu0 0.0
        %427 = vmatprep.subr.mxu0 0.0
        %428 = vmatpush2.msra.mxu0 0.0
        %429 = vmatprep.subr.mxu0 0.0
        %430 = vmatpush2.msra.mxu0 0.0
        %431 = vmatprep.subr.mxu0 0.0
        %432 = vmatpush2.msra.mxu0 0.0
        %433 = vmatprep.subr.mxu0 0.0
        %434 = vmatpush2.msra.mxu0 0.0
        %435 = vmatprep.subr.mxu0 0.0
        %436 = vmatpush2.msra.mxu0 0.0
        %437 = vmatprep.subr.mxu0 0.0
        %438 = vmatpush2.msra.mxu0 0.0
        %439 = vmatprep.subr.mxu0 0.0
        %440 = vmatpush2.msra.mxu0 0.0
        %441 = vmatprep.subr.mxu0 0.0
        %442 = vmatpush2.msra.mxu0 0.0
        %443 = vmatprep.subr.mxu0 0.0
        %444 = vmatpush2.msra.mxu0 0.0
        %445 = vmatprep.subr.mxu0 0.0
        %446 = vmatpush2.msra.mxu0 0.0
        %447 = vmatprep.subr.mxu0 0.0
        %448 = vmatpush2.msra.mxu0 0.0
        %449 = vmatprep.mubr.f32.mxu0 0.0
        %450 = vmatmul.mubr.f32.gmra.mxu0 %v372
        %v451 = vpop.f32.mrf.mxu0
        %v452 = vadd.f32 %v378, %v451
        %v453 = vpop.f32.mrf.mxu0
        %v454 = vadd.f32 %v382, %v453
        %455 = vmatprep.mubr.f32.mxu0 0.0
        %456 = vmatmul.mubr.f32.gmra.mxu0 %v373
        %v457 = vpop.f32.mrf.mxu0
        %v458 = vadd.f32 %v378, %v457
        %v459 = vpop.f32.mrf.mxu0
        %v460 = vadd.f32 %v382, %v459
        %461 = vdwg.mxu0
        %v462 = vmax.f32 %v452, 0.0
        %v463 = vmax.f32 %v454, 0.0
        %v464 = vmax.f32 %v458, 0.0
        %v465 = vmax.f32 %v460, 0.0
        %v467 = vlaneseq
        %v468 = vshrl.u32 %v467, 7
        %v469 = vsub.s32 0, %v468
        %v470 = vrot.slane %v371, %v469
        %v471 = vlaneseq
        %v472 = vshrl.u32 %v471, 7
        %v473 = vsub.s32 1, %v472
        %v474 = vrot.slane %v371, %v473
        %477 = vmatprep.subr.mxu0 %v338
        %478 = vmatpush1.msra.mxu0 %v337
        %479 = vmatprep.subr.mxu0 %v336
        %480 = vmatpush1.msra.mxu0 %v335
        %481 = vmatprep.subr.mxu0 %v334
        %482 = vmatpush1.msra.mxu0 %v333
        %483 = vmatprep.subr.mxu0 %v332
        %484 = vmatpush1.msra.mxu0 %v331
        %485 = vmatprep.subr.mxu0 %v330
        %486 = vmatpush1.msra.mxu0 %v329
        %487 = vmatprep.subr.mxu0 %v328
        %488 = vmatpush1.msra.mxu0 %v327
        %489 = vmatprep.subr.mxu0 %v326
        %490 = vmatpush1.msra.mxu0 %v325
        %491 = vmatprep.subr.mxu0 %v324
        %492 = vmatpush1.msra.mxu0 %v323
        %493 = vmatprep.subr.mxu0 %v322
        %494 = vmatpush1.msra.mxu0 %v321
        %495 = vmatprep.subr.mxu0 %v320
        %496 = vmatpush1.msra.mxu0 %v319
        %497 = vmatprep.subr.mxu0 %v318
        %498 = vmatpush1.msra.mxu0 %v317
        %499 = vmatprep.subr.mxu0 %v316
        %500 = vmatpush1.msra.mxu0 %v315
        %501 = vmatprep.subr.mxu0 %v314
        %502 = vmatpush1.msra.mxu0 %v313
        %503 = vmatprep.subr.mxu0 %v312
        %504 = vmatpush1.msra.mxu0 %v311
        %505 = vmatprep.subr.mxu0 %v310
        %506 = vmatpush1.msra.mxu0 %v309
        %507 = vmatprep.subr.mxu0 %v308
        %508 = vmatpush1.msra.mxu0 %v307
        %509 = vmatprep.subr.mxu0 %v370
        %510 = vmatpush2.msra.mxu0 %v369
        %511 = vmatprep.subr.mxu0 %v368
        %512 = vmatpush2.msra.mxu0 %v367
        %513 = vmatprep.subr.mxu0 %v366
        %514 = vmatpush2.msra.mxu0 %v365
        %515 = vmatprep.subr.mxu0 %v364
        %516 = vmatpush2.msra.mxu0 %v363
        %517 = vmatprep.subr.mxu0 %v362
        %518 = vmatpush2.msra.mxu0 %v361
        %519 = vmatprep.subr.mxu0 %v360
        %520 = vmatpush2.msra.mxu0 %v359
        %521 = vmatprep.subr.mxu0 %v358
        %522 = vmatpush2.msra.mxu0 %v357
        %523 = vmatprep.subr.mxu0 %v356
        %524 = vmatpush2.msra.mxu0 %v355
        %525 = vmatprep.subr.mxu0 %v354
        %526 = vmatpush2.msra.mxu0 %v353
        %527 = vmatprep.subr.mxu0 %v352
        %528 = vmatpush2.msra.mxu0 %v351
        %529 = vmatprep.subr.mxu0 %v350
        %530 = vmatpush2.msra.mxu0 %v349
        %531 = vmatprep.subr.mxu0 %v348
        %532 = vmatpush2.msra.mxu0 %v347
        %533 = vmatprep.subr.mxu0 %v346
        %534 = vmatpush2.msra.mxu0 %v345
        %535 = vmatprep.subr.mxu0 %v344
        %536 = vmatpush2.msra.mxu0 %v343
        %537 = vmatprep.subr.mxu0 %v342
        %538 = vmatpush2.msra.mxu0 %v341
        %539 = vmatprep.subr.mxu0 %v340
        %540 = vmatpush2.msra.mxu0 %v339
        %541 = vmatprep.mubr.f32.mxu0 %v463
        %542 = vmatmul.mubr.f32.gmra.mxu0 %v462
        %v543 = vpop.f32.mrf.mxu0
        %v544 = vadd.f32 %v470, %v543
        %v545 = vpop.f32.mrf.mxu0
        %v546 = vadd.f32 %v474, %v545
        %547 = vmatprep.mubr.f32.mxu0 %v465
        %548 = vmatmul.mubr.f32.gmra.mxu0 %v464
        %v549 = vpop.f32.mrf.mxu0
        %v550 = vadd.f32 %v470, %v549
        %v551 = vpop.f32.mrf.mxu0
        %v552 = vadd.f32 %v474, %v551
        %553 = vdwg.mxu0
        %554 = vst [vmem:[%s271] sm:$0xff] %v544
        %555 = vst [vmem:[%s271 + $0x8] sm:$0xff] %v546
        %556 = vst [vmem:[%s271 + $0x10] sm:$0xff] %v550
        %557 = vst [vmem:[%s271 + $0x18] sm:$0xff] %v552
        %s558 = sand.u32 %s141, 1
        %s559 = scalar_lea.sflag [#allocation4], %s558
        %s560 = sand.u32 %s141, 1
        %s561 = smul.addr %s560, 32
        %s562 = scalar_lea.vmem [#allocation8], %s561
        // Predicated region
        $region53: #{tpu_custom_call.1} parent=39 // pred_check
          %p563 = pneg %p151
        $region54: #{tpu_custom_call.1} parent=39 // pred_check_branch
          %565 = sbr.rel (%p563) target = $region56
        $region55: #{tpu_custom_call.1} parent=39 // pred_region
          %s566 = smul.u32 2, %s23
          %s568 = ssub.s32 512, 512
          %569 = vsyncadd %s559, %s568
          %s570 = smul.addr %s566, 2
          %s571 = smul.addr %s570, 128
          %s572 = scalar_lea.hbm %s5, %s571
          %s573 = sshll.u32 %s562, 4
          %s574 = int_to_ptr.vmem [resolvable:$true] %s573
          %579 = dma.vmem_to_hbm [thread:$0]  %s574, 512, %s572, %s559, 256, 256, 16
        $region56: #{tpu_custom_call.1} parent=39 // pred_fallthru
          _
      $region40: #{tpu_custom_call.1} parent=5 // pred_fallthru
        _
      %p580 = scmp.le.s32.totalorder 2, %s18
      // Predicated region
      $region57: #{tpu_custom_call.1} parent=5 // pred_check
        %p581 = pneg %p580
      $region58: #{tpu_custom_call.1} parent=5 // pred_check_branch
        %583 = sbr.rel (%p581) target = $region60
      $region59: #{tpu_custom_call.1} parent=5 // pred_region
        %s584 = ssub.s32 %s18, 2
        // Predicated region
        $region61: #{tpu_custom_call.1} parent=59 // pred_check
          %p585 = pneg %p157
        $region62: #{tpu_custom_call.1} parent=59 // pred_check_branch
          %587 = sbr.rel (%p585) target = $region64
        $region63: #{tpu_custom_call.1} parent=59 // pred_region
          %s588 = sand.u32 %s142, 1
          %s589 = scalar_lea.sflag [#allocation4], %s588
          %s590 = sand.u32 %s142, 1
          %s591 = smul.addr %s590, 32
          %s592 = scalar_lea.vmem [#allocation8], %s591
          %593 = dma.done %s589, 512
        $region64: #{tpu_custom_call.1} parent=59 // pred_fallthru
          _
      $region60: #{tpu_custom_call.1} parent=5 // pred_fallthru
        _
    $region6: #{tpu_custom_call.1} parent=1 // loop_footer
      %s22 = sadd.s32 1, %s18
    $region7: #{tpu_custom_call.1} parent=1 // loop_footer_branch
      %17 = sbr.rel target = $region3
    $region8: #{tpu_custom_call.1} parent=1 // loop_exit
      _
    %594 = vsyncpa [#allocation3], 1
    %s595 = scalar_lea.sflag [#allocation3], 1
    %596 = vsyncpa %s595, 1
    %597 = vsyncpa [#allocation6], 1
    %598 = vsyncpa [#allocation4], 1
    %s599 = scalar_lea.sflag [#allocation4], 1
    %600 = vsyncpa %s599, 1

</llo_original>
